<compile_context>
chip_gen: v6e
topology: v6e:2x2x1
jax: 0.10.0
libtpu: 0.0.40
codegen_flags: <defaults>
</compile_context>

<pallas_src>
import functools
import jax
import jax.numpy as jnp
from jax.experimental import pallas as pl
from jax.experimental.pallas import tpu as pltpu

EPS = 1e-6        # LayerNorm eps from the annotated-transformer LayerNorm
NEG_INF = -1e9    # value used by masked_fill


# ---------------------------------------------------------------------------
# in-kernel helpers (f32 math)
# ---------------------------------------------------------------------------
def _layernorm(x, a, b, approx):
    # Matches the custom LayerNorm: torch.std() is unbiased (ddof=1) and the
    # normalization is (x - mean) / (std + eps), NOT sqrt(var + eps).
    d = x.shape[-1]
    mean = jnp.mean(x, axis=-1, keepdims=True)
    var = jnp.sum((x - mean) ** 2, axis=-1, keepdims=True) * (1.0 / (d - 1))
    inv = pl.reciprocal(jnp.sqrt(var) + EPS, approx=approx)   # EUP slot -> ~free
    return a * (x - mean) * inv + b


def _softmax(x, approx):
    m = jnp.max(x, axis=-1, keepdims=True)
    e = jnp.exp(x - m)
    return e * pl.reciprocal(jnp.sum(e, axis=-1, keepdims=True), approx=approx)


# ---------------------------------------------------------------------------
# fused encoder-stack kernel: one batch BLOCK per outer grid step, layers inner
# ---------------------------------------------------------------------------
def encoder_stack_kernel(num_heads, compute_dtype,
                         x_ref, bias_ref, wqkv_ref, wo_ref, w1_ref, w2_ref,
                         vecd_ref, b1_ref, fin_ref,
                         o_ref,
                         act_ref):
    layer = pl.program_id(1)
    n_layers = pl.num_programs(1)

    @pl.when(layer == 0)
    def _():
        act_ref[...] = x_ref[...]          # load the batch block into the resident scratch

    TB, S, D = act_ref.shape
    M = TB * S
    H = num_heads
    dk = D // H
    approx = compute_dtype != jnp.float32  # approx reciprocal only on the bf16 path
    cast = lambda t: t.astype(compute_dtype)

    x = act_ref[...].reshape(M, D)         # [M, D] f32, VMEM-resident across layers
    bias = bias_ref[...]                   # [TB, Sm, S] additive mask bias, f32

    # packed per-layer vectors: ln1_a, ln1_b, ln2_a, ln2_b, bq*scale, bk, bv, bo, b2
    vec = vecd_ref[0]                      # [9, D] f32
    ln1_a, ln1_b = vec[0:1], vec[1:2]
    ln2_a, ln2_b = vec[2:3], vec[3:4]
    bq, bk, bv = vec[4:5], vec[5:6], vec[6:7]
    bo, b2 = vec[7:8], vec[8:9]
    b1 = b1_ref[0]                         # [1, d_ff] f32

    # ---- sublayer 0: x + W_o(MHA(LayerNorm(x), mask)) ----
    xn = cast(_layernorm(x, ln1_a, ln1_b, approx))
    # fused QKV projection (weights pre-transposed + concatenated on host, scale folded)
    qkv = jnp.dot(xn, wqkv_ref[0], preferred_element_type=jnp.float32)   # [M, 3D]
    q3 = cast(qkv[:, 0 * D:1 * D] + bq).reshape(TB, S, D)
    k3 = cast(qkv[:, 1 * D:2 * D] + bk).reshape(TB, S, D)
    v3 = cast(qkv[:, 2 * D:3 * D] + bv).reshape(TB, S, D)

    heads = []
    for h in range(H):                     # static head loop; scores batched over TB rows
        sl = slice(h * dk, (h + 1) * dk)
        s = jnp.einsum('bqd,bkd->bqk', q3[:, :, sl], k3[:, :, sl],
                       preferred_element_type=jnp.float32) + bias        # [TB, S, S]
        p = _softmax(s, approx)
        heads.append(jnp.einsum('bqk,bkd->bqd', cast(p), v3[:, :, sl],
                                preferred_element_type=jnp.float32))     # [TB, S, dk]
    ctx = cast(jnp.concatenate(heads, axis=-1).reshape(M, D))            # [M, D]
    x = x + jnp.dot(ctx, wo_ref[0], preferred_element_type=jnp.float32) + bo

    # ---- sublayer 1: x + FFN(LayerNorm(x)) ----
    xn2 = cast(_layernorm(x, ln2_a, ln2_b, approx))
    hid = jnp.dot(xn2, w1_ref[0], preferred_element_type=jnp.float32) + b1
    hid = cast(jnp.maximum(hid, 0.0))
    x = x + jnp.dot(hid, w2_ref[0], preferred_element_type=jnp.float32) + b2

    act_ref[...] = x.reshape(TB, S, D)     # carry to the next layer (stays in VMEM)

    @pl.when(layer == n_layers - 1)
    def _():
        # fused final LayerNorm epilogue (no separate pallas_call / HBM round trip)
        fin = fin_ref[...]                 # [2, D]: row 0 = a, row 1 = b
        o_ref[...] = _layernorm(x, fin[0:1], fin[1:2], approx).reshape(TB, S, D)


# ---------------------------------------------------------------------------
# wrapper
# ---------------------------------------------------------------------------
def _pick_vmem_limit(kernel_bytes):
    cap = 64 * 1024 * 1024                 # safe default (v7x per-TC VMEM)
    try:
        cap = int(pltpu.get_tpu_info().vmem_capacity_bytes)
    except Exception:
        pass
    headroom = 8 * 1024 * 1024             # leave room for Mosaic internal scratch
    want = max(32 * 1024 * 1024, int(kernel_bytes * 2))
    return int(max(16 * 1024 * 1024, min(cap - headroom, want)))


def _pick_batch_block(B, S, target_rows=256):
    # biggest divisor of B whose block gives ~target_rows MXU rows (TB*S)
    tb = 1
    for c in range(1, B + 1):
        if B % c == 0 and c * S <= max(S, target_rows):
            tb = c
    return tb


def transformer_encoder(x, mask, layer_params, final_a, final_b, num_heads,
                        compute_dtype=jnp.bfloat16, batch_block=None):
    B, S, D = x.shape
    L = len(layer_params)
    d_ff = layer_params[0]["w1"].shape[0]
    assert D % num_heads == 0
    dk = D // num_heads
    scale = jnp.float32(1.0 / (dk ** 0.5))
    cdt = compute_dtype

    # --- host-side parameter plumbing (free): stack layers, pre-transpose, fuse QKV ---
    # torch Linear weight [out, in] -> [in, out]; 1/sqrt(dk) folded into Wq / bq.
    wqkv_s = jnp.stack([
        jnp.concatenate([p["wq"].T * scale, p["wk"].T, p["wv"].T], axis=1)
        for p in layer_params]).astype(cdt)                              # [L, D, 3D]
    wo_s = jnp.stack([p["wo"].T for p in layer_params]).astype(cdt)      # [L, D, D]
    w1_s = jnp.stack([p["w1"].T for p in layer_params]).astype(cdt)      # [L, D, d_ff]
    w2_s = jnp.stack([p["w2"].T for p in layer_params]).astype(cdt)      # [L, d_ff, D]

    # pack the 9 D-sized per-layer vectors into a single [L, 9, D] array (one DMA/layer)
    vecd_s = jnp.stack([
        jnp.concatenate([p["ln1_a"], p["ln1_b"], p["ln2_a"], p["ln2_b"],
                         p["bq"] * scale, p["bk"], p["bv"], p["bo"], p["b2"]], axis=0)
        for p in layer_params]).astype(jnp.float32)                      # [L, 9, D]
    b1_s = jnp.stack([p["b1"] for p in layer_params]).astype(jnp.float32)  # [L, 1, d_ff]
    fin = jnp.concatenate([final_a, final_b], axis=0).astype(jnp.float32)  # [2, D]

    # --- additive mask bias (compact [B, 1, S] for key-padding masks) ---
    mask_b = mask[:, None, :] if mask.ndim == 2 else mask                # [B, Sm, S]
    bias = jnp.where(mask_b == 0, jnp.float32(NEG_INF), jnp.float32(0.0))
    Sm = bias.shape[1]

    # --- batch blocking: amortize per-layer weight DMA over TB rows ---
    tb = _pick_batch_block(B, S) if batch_block is None else batch_block
    assert B % tb == 0
    grid = (B // tb, L)                    # batch blocks outer (parallel), layers inner

    def w_spec(*shape):
        return pl.BlockSpec((1,) + tuple(shape), lambda bb, l: (l, 0, 0))

    in_specs = [
        pl.BlockSpec((tb, S, D), lambda bb, l: (bb, 0, 0)),    # x (batch block)
        pl.BlockSpec((tb, Sm, S), lambda bb, l: (bb, 0, 0)),   # additive mask bias
        w_spec(D, 3 * D),                                      # fused Wqkv
        w_spec(D, D),                                          # Wo
        w_spec(D, d_ff),                                       # W1
        w_spec(d_ff, D),                                       # W2
        w_spec(9, D),                                          # packed per-layer vectors
        w_spec(1, d_ff),                                       # b1
        pl.BlockSpec((2, D), lambda bb, l: (0, 0)),            # final norm a/b
    ]

    # --- VMEM budget derived from the actual block sizes (double-buffered in/out) ---
    bpe = jnp.dtype(cdt).itemsize
    weight_bytes = (D * 3 * D + D * D + D * d_ff + d_ff * D) * bpe + (9 * D + d_ff + 2 * D) * 4
    io_bytes = (2 * tb * S * D + tb * Sm * S) * 4
    inter_bytes = tb * S * (3 * D + d_ff + 2 * D) * 4 + 2 * tb * S * S * 4
    est = 2 * (weight_bytes + io_bytes) + tb * S * D * 4 + inter_bytes
    vmem_limit = _pick_vmem_limit(est)

    return pl.pallas_call(
        functools.partial(encoder_stack_kernel, num_heads, cdt),
        out_shape=jax.ShapeDtypeStruct((B, S, D), jnp.float32),
        grid=grid,
        in_specs=in_specs,
        out_specs=pl.BlockSpec((tb, S, D), lambda bb, l: (bb, 0, 0)),
        scratch_shapes=[pltpu.VMEM((tb, S, D), jnp.float32)],  # resident activation block
        compiler_params=pltpu.CompilerParams(
            dimension_semantics=("parallel", "arbitrary"),
            vmem_limit_bytes=vmem_limit),
    )(x.astype(jnp.float32), bias,
      wqkv_s, wo_s, w1_s, w2_s, vecd_s, b1_s, fin)


# ---------------------------------------------------------------------------
# pure-JAX reference (same math, torch-layout weights) for verification
# ---------------------------------------------------------------------------
def _ref_ln(x, a, b):
    d = x.shape[-1]
    mean = x.mean(-1, keepdims=True)
    var = ((x - mean) ** 2).sum(-1, keepdims=True) / (d - 1)
    return a * (x - mean) / (jnp.sqrt(var) + EPS) + b


def ref_encoder(x, mask, layer_params, final_a, final_b, num_heads):
    B, S, D = x.shape
    dk = D // num_heads
    mask4 = mask[:, None, None, :] if mask.ndim == 2 else mask[:, None, :, :]
    for p in layer_params:
        xn = _ref_ln(x, p["ln1_a"], p["ln1_b"])
        q = xn @ p["wq"].T + p["bq"]
        k = xn @ p["wk"].T + p["bk"]
        v = xn @ p["wv"].T + p["bv"]
        qh = q.reshape(B, S, num_heads, dk).transpose(0, 2, 1, 3)
        kh = k.reshape(B, S, num_heads, dk).transpose(0, 2, 1, 3)
        vh = v.reshape(B, S, num_heads, dk).transpose(0, 2, 1, 3)
        scores = qh @ kh.transpose(0, 1, 3, 2) / jnp.sqrt(jnp.float32(dk))
        scores = jnp.where(mask4 == 0, NEG_INF, scores)
        p_attn = jax.nn.softmax(scores, axis=-1)
        attn = (p_attn @ vh).transpose(0, 2, 1, 3).reshape(B, S, D)
        x = x + attn @ p["wo"].T + p["bo"]
        xn = _ref_ln(x, p["ln2_a"], p["ln2_b"])
        x = x + jnp.maximum(xn @ p["w1"].T + p["b1"], 0.0) @ p["w2"].T + p["b2"]
    return _ref_ln(x, final_a, final_b)


# ---------------------------------------------------------------------------
# deterministic parameter construction (shapes per the module's __init__)
# ---------------------------------------------------------------------------
def _linear(key, out_f, in_f):
    kw, kb = jax.random.split(key)
    lim = 1.0 / jnp.sqrt(jnp.float32(in_f))
    w = jax.random.uniform(kw, (out_f, in_f), jnp.float32, -lim, lim)
    b = jax.random.uniform(kb, (1, out_f), jnp.float32, -lim, lim)
    return w, b


def make_params(key, num_layers, d_model, d_ff):
    layer_params = []
    for _ in range(num_layers):
        key, kq, kk, kv, ko, k1, k2 = jax.random.split(key, 7)
        wq, bq = _linear(kq, d_model, d_model)
        wk, bk = _linear(kk, d_model, d_model)
        wv, bv = _linear(kv, d_model, d_model)
        wo, bo = _linear(ko, d_model, d_model)
        w1, b1 = _linear(k1, d_ff, d_model)
        w2, b2 = _linear(k2, d_model, d_ff)
        layer_params.append(dict(
            ln1_a=jnp.ones((1, d_model), jnp.float32),
            ln1_b=jnp.zeros((1, d_model), jnp.float32),
            wq=wq, bq=bq, wk=wk, bk=bk, wv=wv, bv=bv, wo=wo, bo=bo,
            ln2_a=jnp.ones((1, d_model), jnp.float32),
            ln2_b=jnp.zeros((1, d_model), jnp.float32),
            w1=w1, b1=b1, w2=w2, b2=b2))
    final_a = jnp.ones((1, d_model), jnp.float32)
    final_b = jnp.zeros((1, d_model), jnp.float32)
    return layer_params, final_a, final_b


if __name__ == "__main__":
    B, S, D, H, D_FF, N_LAYERS = 2, 8, 32, 4, 64, 2

    key = jax.random.PRNGKey(0)
    kx, kp = jax.random.split(key)
    x = jax.random.normal(kx, (B, S, D), jnp.float32)

    # padding mask: batch 0 attends to all 8 positions, batch 1 only to first 6
    lengths = jnp.array([8, 6], jnp.int32)
    key_mask = (jnp.arange(S)[None, :] < lengths[:, None]).astype(jnp.float32)  # [B, S]

    layer_params, final_a, final_b = make_params(kp, N_LAYERS, D, D_FF)

    ref = ref_encoder(x, key_mask, layer_params, final_a, final_b, H)

    # exact-math path (f32 matmuls, exact reciprocal) -- tight check vs reference
    out_f32 = transformer_encoder(x, key_mask, layer_params, final_a, final_b, H,
                                  compute_dtype=jnp.float32)
    out_f32 = jax.block_until_ready(out_f32)
    assert out_f32.shape == (B, S, D)
    assert jnp.allclose(out_f32, ref, atol=1e-4, rtol=1e-4), "f32 kernel mismatch"

    # performance path (bf16 matmuls, f32 accumulation, approx reciprocal) -- loose check
    out_bf16 = transformer_encoder(x, key_mask, layer_params, final_a, final_b, H,
                                   compute_dtype=jnp.bfloat16)
    out_bf16 = jax.block_until_ready(out_bf16)
    assert out_bf16.shape == (B, S, D)
    assert jnp.allclose(out_bf16, ref, atol=5e-2, rtol=5e-2), "bf16 kernel mismatch"

    print("KERNEL_OK")
</pallas_src>

<mosaic_0001>
module attributes {stable_mosaic.version = 11 : i64} {
  func.func @encoder_stack_kernel(%arg0: i32, %arg1: i32, %arg2: memref<2x8x32xf32, #tpu.memory_space<vmem>>, %arg3: memref<2x1x8xf32, #tpu.memory_space<vmem>>, %arg4: memref<1x32x96xf32, #tpu.memory_space<vmem>>, %arg5: memref<1x32x32xf32, #tpu.memory_space<vmem>>, %arg6: memref<1x32x64xf32, #tpu.memory_space<vmem>>, %arg7: memref<1x64x32xf32, #tpu.memory_space<vmem>>, %arg8: memref<1x9x32xf32, #tpu.memory_space<vmem>>, %arg9: memref<1x1x64xf32, #tpu.memory_space<vmem>>, %arg10: memref<2x32xf32, #tpu.memory_space<vmem>>, %arg11: memref<2x8x32xf32, #tpu.memory_space<vmem>>, %arg12: memref<2x8x32xf32, #tpu.memory_space<vmem>>) attributes {dimension_semantics = [#tpu.dimension_semantics<parallel>, #tpu.dimension_semantics<arbitrary>], iteration_bounds = array<i64: 1, 2>, scalar_prefetch = 0 : i64, scratch_operands = 1 : i64, tpu.core_type = #tpu.core_type<tc>, window_params = [{transform_indices = @transform_0, window_bounds = array<i64: 2, 8, 32>}, {transform_indices = @transform_1, window_bounds = array<i64: 2, 1, 8>}, {transform_indices = @transform_2, window_bounds = array<i64: 1, 32, 96>}, {transform_indices = @transform_3, window_bounds = array<i64: 1, 32, 32>}, {transform_indices = @transform_4, window_bounds = array<i64: 1, 32, 64>}, {transform_indices = @transform_5, window_bounds = array<i64: 1, 64, 32>}, {transform_indices = @transform_6, window_bounds = array<i64: 1, 9, 32>}, {transform_indices = @transform_7, window_bounds = array<i64: 1, 1, 64>}, {pipeline_mode = #tpu.pipeline_mode<synchronous>, transform_indices = @transform_8, window_bounds = array<i64: 2, 32>}, {transform_indices = @transform_9, window_bounds = array<i64: 2, 8, 32>}]} {
    %c0_i32 = arith.constant 0 : i32
    %0 = arith.cmpi eq, %arg1, %c0_i32 : i32
    %1 = arith.extui %0 : i1 to i32
    %c0_i32_0 = arith.constant 0 : i32
    %2 = arith.cmpi ne, %1, %c0_i32_0 : i32
    scf.if %2 {
      %c0_58 = arith.constant 0 : index
      %c0_59 = arith.constant 0 : index
      %c0_60 = arith.constant 0 : index
      %174 = vector.load %arg2[%c0_58, %c0_59, %c0_60] : memref<2x8x32xf32, #tpu.memory_space<vmem>>, vector<2x8x32xf32>
      %c0_61 = arith.constant 0 : index
      %c0_62 = arith.constant 0 : index
      %c0_63 = arith.constant 0 : index
      %175 = vector.load %arg12[%c0_61, %c0_62, %c0_63] : memref<2x8x32xf32, #tpu.memory_space<vmem>>, vector<2x8x32xf32>
      tpu.vector_store %arg12[%c0_61, %c0_62, %c0_63], %174 {strides = array<i32>} : memref<2x8x32xf32, #tpu.memory_space<vmem>>, vector<2x8x32xf32>,
    } else {
    }
    %c0 = arith.constant 0 : index
    %c0_1 = arith.constant 0 : index
    %c0_2 = arith.constant 0 : index
    %3 = vector.load %arg12[%c0, %c0_1, %c0_2] : memref<2x8x32xf32, #tpu.memory_space<vmem>>, vector<2x8x32xf32>
    %4 = vector.shape_cast %3 : vector<2x8x32xf32> to vector<16x32xf32>
    %c0_3 = arith.constant 0 : index
    %c0_4 = arith.constant 0 : index
    %c0_5 = arith.constant 0 : index
    %5 = vector.load %arg3[%c0_3, %c0_4, %c0_5] : memref<2x1x8xf32, #tpu.memory_space<vmem>>, vector<2x1x8xf32>
    %c0_6 = arith.constant 0 : index
    %c0_7 = arith.constant 0 : index
    %c0_8 = arith.constant 0 : index
    %6 = vector.load %arg8[%c0_6, %c0_7, %c0_8] : memref<1x9x32xf32, #tpu.memory_space<vmem>>, vector<1x9x32xf32>
    %7 = vector.shape_cast %6 : vector<1x9x32xf32> to vector<9x32xf32>
    %8 = vector.extract_strided_slice %7 {offsets = [0, 0], sizes = [1, 32], strides = [1, 1]} : vector<9x32xf32> to vector<1x32xf32>
    %9 = vector.extract_strided_slice %7 {offsets = [1, 0], sizes = [1, 32], strides = [1, 1]} : vector<9x32xf32> to vector<1x32xf32>
    %10 = vector.extract_strided_slice %7 {offsets = [2, 0], sizes = [1, 32], strides = [1, 1]} : vector<9x32xf32> to vector<1x32xf32>
    %11 = vector.extract_strided_slice %7 {offsets = [3, 0], sizes = [1, 32], strides = [1, 1]} : vector<9x32xf32> to vector<1x32xf32>
    %12 = vector.extract_strided_slice %7 {offsets = [4, 0], sizes = [1, 32], strides = [1, 1]} : vector<9x32xf32> to vector<1x32xf32>
    %13 = vector.extract_strided_slice %7 {offsets = [5, 0], sizes = [1, 32], strides = [1, 1]} : vector<9x32xf32> to vector<1x32xf32>
    %14 = vector.extract_strided_slice %7 {offsets = [6, 0], sizes = [1, 32], strides = [1, 1]} : vector<9x32xf32> to vector<1x32xf32>
    %15 = vector.extract_strided_slice %7 {offsets = [7, 0], sizes = [1, 32], strides = [1, 1]} : vector<9x32xf32> to vector<1x32xf32>
    %16 = vector.extract_strided_slice %7 {offsets = [8, 0], sizes = [1, 32], strides = [1, 1]} : vector<9x32xf32> to vector<1x32xf32>
    %c0_9 = arith.constant 0 : index
    %c0_10 = arith.constant 0 : index
    %c0_11 = arith.constant 0 : index
    %17 = vector.load %arg9[%c0_9, %c0_10, %c0_11] : memref<1x1x64xf32, #tpu.memory_space<vmem>>, vector<1x1x64xf32>
    %18 = vector.shape_cast %17 : vector<1x1x64xf32> to vector<1x64xf32>
    %cst = arith.constant dense<0.000000e+00> : vector<16xf32>
    %19 = vector.multi_reduction <add>, %4, %cst [1] : vector<16x32xf32> to vector<16xf32>
    %20 = vector.shape_cast %19 : vector<16xf32> to vector<16x1xf32>
    %cst_12 = arith.constant 3.200000e+01 : f32
    %21 = vector.broadcast %cst_12 : f32 to vector<16x1xf32>
    %22 = arith.divf %20, %21 : vector<16x1xf32>
    %23 = vector.broadcast %22 : vector<16x1xf32> to vector<16x32xf32>
    %24 = arith.subf %4, %23 : vector<16x32xf32>
    %25 = arith.mulf %24, %24 : vector<16x32xf32>
    %cst_13 = arith.constant dense<0.000000e+00> : vector<16xf32>
    %26 = vector.multi_reduction <add>, %25, %cst_13 [1] : vector<16x32xf32> to vector<16xf32>
    %27 = vector.shape_cast %26 : vector<16xf32> to vector<16x1xf32>
    %cst_14 = arith.constant 0.0322580636 : f32
    %28 = vector.broadcast %cst_14 : f32 to vector<16x1xf32>
    %29 = arith.mulf %27, %28 : vector<16x1xf32>
    %30 = math.sqrt %29 : vector<16x1xf32>
    %cst_15 = arith.constant 9.99999997E-7 : f32
    %31 = vector.broadcast %cst_15 : f32 to vector<16x1xf32>
    %32 = arith.addf %30, %31 : vector<16x1xf32>
    %33 = tpu.reciprocal %32 : vector<16x1xf32> -> vector<16x1xf32>
    %34 = vector.broadcast %22 : vector<16x1xf32> to vector<16x32xf32>
    %35 = arith.subf %4, %34 : vector<16x32xf32>
    %36 = vector.broadcast %8 : vector<1x32xf32> to vector<16x32xf32>
    %37 = arith.mulf %36, %35 : vector<16x32xf32>
    %38 = vector.broadcast %33 : vector<16x1xf32> to vector<16x32xf32>
    %39 = arith.mulf %37, %38 : vector<16x32xf32>
    %40 = vector.broadcast %9 : vector<1x32xf32> to vector<16x32xf32>
    %41 = arith.addf %39, %40 : vector<16x32xf32>
    %c0_16 = arith.constant 0 : index
    %c0_17 = arith.constant 0 : index
    %c0_18 = arith.constant 0 : index
    %42 = vector.load %arg4[%c0_16, %c0_17, %c0_18] : memref<1x32x96xf32, #tpu.memory_space<vmem>>, vector<1x32x96xf32>
    %43 = vector.shape_cast %42 : vector<1x32x96xf32> to vector<32x96xf32>
    %cst_19 = arith.constant dense<0.000000e+00> : vector<16x96xf32>
    %44 = tpu.matmul %41, %43, %cst_19 {dimension_numbers = #tpu.dot_dimension_numbers<[1], [0], [0], [1], [0, 0, 1, 1], [], []>} : vector<16x32xf32>, vector<32x96xf32>, vector<16x96xf32> -> vector<16x96xf32>
    %45 = vector.extract_strided_slice %44 {offsets = [0, 0], sizes = [16, 32], strides = [1, 1]} : vector<16x96xf32> to vector<16x32xf32>
    %46 = vector.broadcast %12 : vector<1x32xf32> to vector<16x32xf32>
    %47 = arith.addf %45, %46 : vector<16x32xf32>
    %48 = vector.shape_cast %47 : vector<16x32xf32> to vector<2x8x32xf32>
    %49 = vector.extract_strided_slice %44 {offsets = [0, 32], sizes = [16, 32], strides = [1, 1]} : vector<16x96xf32> to vector<16x32xf32>
    %50 = vector.broadcast %13 : vector<1x32xf32> to vector<16x32xf32>
    %51 = arith.addf %49, %50 : vector<16x32xf32>
    %52 = vector.shape_cast %51 : vector<16x32xf32> to vector<2x8x32xf32>
    %53 = vector.extract_strided_slice %44 {offsets = [0, 64], sizes = [16, 32], strides = [1, 1]} : vector<16x96xf32> to vector<16x32xf32>
    %54 = vector.broadcast %14 : vector<1x32xf32> to vector<16x32xf32>
    %55 = arith.addf %53, %54 : vector<16x32xf32>
    %56 = vector.shape_cast %55 : vector<16x32xf32> to vector<2x8x32xf32>
    %57 = vector.extract_strided_slice %48 {offsets = [0, 0, 0], sizes = [2, 8, 8], strides = [1, 1, 1]} : vector<2x8x32xf32> to vector<2x8x8xf32>
    %58 = vector.extract_strided_slice %52 {offsets = [0, 0, 0], sizes = [2, 8, 8], strides = [1, 1, 1]} : vector<2x8x32xf32> to vector<2x8x8xf32>
    "tpu.trace_start"() <{level = 10 : i32, message = "bqd,bkd->bqk"}> : () -> ()
    %cst_20 = arith.constant dense<0.000000e+00> : vector<2x8x8xf32>
    %59 = tpu.matmul %57, %58, %cst_20 {dimension_numbers = #tpu.dot_dimension_numbers<[2], [2], [1], [1], [0, 0, 0, 1, 1, 1], [0], [0]>} : vector<2x8x8xf32>, vector<2x8x8xf32>, vector<2x8x8xf32> -> vector<2x8x8xf32>
    "tpu.trace_stop"() : () -> ()
    %60 = vector.broadcast %5 : vector<2x1x8xf32> to vector<2x8x8xf32>
    %61 = arith.addf %59, %60 : vector<2x8x8xf32>
    %cst_21 = arith.constant dense<0xFF800000> : vector<2x8xf32>
    %62 = vector.multi_reduction <maximumf>, %61, %cst_21 [2] : vector<2x8x8xf32> to vector<2x8xf32>
    %63 = vector.shape_cast %62 : vector<2x8xf32> to vector<2x8x1xf32>
    %64 = vector.broadcast %63 : vector<2x8x1xf32> to vector<2x8x8xf32>
    %65 = arith.subf %61, %64 : vector<2x8x8xf32>
    %66 = math.exp %65 : vector<2x8x8xf32>
    %cst_22 = arith.constant dense<0.000000e+00> : vector<2x8xf32>
    %67 = vector.multi_reduction <add>, %66, %cst_22 [2] : vector<2x8x8xf32> to vector<2x8xf32>
    %68 = vector.shape_cast %67 : vector<2x8xf32> to vector<2x8x1xf32>
    %69 = tpu.reciprocal %68 : vector<2x8x1xf32> -> vector<2x8x1xf32>
    %70 = vector.broadcast %69 : vector<2x8x1xf32> to vector<2x8x8xf32>
    %71 = arith.mulf %66, %70 : vector<2x8x8xf32>
    %72 = vector.extract_strided_slice %56 {offsets = [0, 0, 0], sizes = [2, 8, 8], strides = [1, 1, 1]} : vector<2x8x32xf32> to vector<2x8x8xf32>
    "tpu.trace_start"() <{level = 10 : i32, message = "bqk,bkd->bqd"}> : () -> ()
    %cst_23 = arith.constant dense<0.000000e+00> : vector<2x8x8xf32>
    %73 = tpu.matmul %71, %72, %cst_23 {dimension_numbers = #tpu.dot_dimension_numbers<[2], [1], [1], [2], [0, 0, 0, 1, 1, 2], [0], [0]>} : vector<2x8x8xf32>, vector<2x8x8xf32>, vector<2x8x8xf32> -> vector<2x8x8xf32>
    "tpu.trace_stop"() : () -> ()
    %74 = vector.extract_strided_slice %48 {offsets = [0, 0, 8], sizes = [2, 8, 8], strides = [1, 1, 1]} : vector<2x8x32xf32> to vector<2x8x8xf32>
    %75 = vector.extract_strided_slice %52 {offsets = [0, 0, 8], sizes = [2, 8, 8], strides = [1, 1, 1]} : vector<2x8x32xf32> to vector<2x8x8xf32>
    "tpu.trace_start"() <{level = 10 : i32, message = "bqd,bkd->bqk"}> : () -> ()
    %cst_24 = arith.constant dense<0.000000e+00> : vector<2x8x8xf32>
    %76 = tpu.matmul %74, %75, %cst_24 {dimension_numbers = #tpu.dot_dimension_numbers<[2], [2], [1], [1], [0, 0, 0, 1, 1, 1], [0], [0]>} : vector<2x8x8xf32>, vector<2x8x8xf32>, vector<2x8x8xf32> -> vector<2x8x8xf32>
    "tpu.trace_stop"() : () -> ()
    %77 = vector.broadcast %5 : vector<2x1x8xf32> to vector<2x8x8xf32>
    %78 = arith.addf %76, %77 : vector<2x8x8xf32>
    %cst_25 = arith.constant dense<0xFF800000> : vector<2x8xf32>
    %79 = vector.multi_reduction <maximumf>, %78, %cst_25 [2] : vector<2x8x8xf32> to vector<2x8xf32>
    %80 = vector.shape_cast %79 : vector<2x8xf32> to vector<2x8x1xf32>
    %81 = vector.broadcast %80 : vector<2x8x1xf32> to vector<2x8x8xf32>
    %82 = arith.subf %78, %81 : vector<2x8x8xf32>
    %83 = math.exp %82 : vector<2x8x8xf32>
    %cst_26 = arith.constant dense<0.000000e+00> : vector<2x8xf32>
    %84 = vector.multi_reduction <add>, %83, %cst_26 [2] : vector<2x8x8xf32> to vector<2x8xf32>
    %85 = vector.shape_cast %84 : vector<2x8xf32> to vector<2x8x1xf32>
    %86 = tpu.reciprocal %85 : vector<2x8x1xf32> -> vector<2x8x1xf32>
    %87 = vector.broadcast %86 : vector<2x8x1xf32> to vector<2x8x8xf32>
    %88 = arith.mulf %83, %87 : vector<2x8x8xf32>
    %89 = vector.extract_strided_slice %56 {offsets = [0, 0, 8], sizes = [2, 8, 8], strides = [1, 1, 1]} : vector<2x8x32xf32> to vector<2x8x8xf32>
    "tpu.trace_start"() <{level = 10 : i32, message = "bqk,bkd->bqd"}> : () -> ()
    %cst_27 = arith.constant dense<0.000000e+00> : vector<2x8x8xf32>
    %90 = tpu.matmul %88, %89, %cst_27 {dimension_numbers = #tpu.dot_dimension_numbers<[2], [1], [1], [2], [0, 0, 0, 1, 1, 2], [0], [0]>} : vector<2x8x8xf32>, vector<2x8x8xf32>, vector<2x8x8xf32> -> vector<2x8x8xf32>
    "tpu.trace_stop"() : () -> ()
    %91 = vector.extract_strided_slice %48 {offsets = [0, 0, 16], sizes = [2, 8, 8], strides = [1, 1, 1]} : vector<2x8x32xf32> to vector<2x8x8xf32>
    %92 = vector.extract_strided_slice %52 {offsets = [0, 0, 16], sizes = [2, 8, 8], strides = [1, 1, 1]} : vector<2x8x32xf32> to vector<2x8x8xf32>
    "tpu.trace_start"() <{level = 10 : i32, message = "bqd,bkd->bqk"}> : () -> ()
    %cst_28 = arith.constant dense<0.000000e+00> : vector<2x8x8xf32>
    %93 = tpu.matmul %91, %92, %cst_28 {dimension_numbers = #tpu.dot_dimension_numbers<[2], [2], [1], [1], [0, 0, 0, 1, 1, 1], [0], [0]>} : vector<2x8x8xf32>, vector<2x8x8xf32>, vector<2x8x8xf32> -> vector<2x8x8xf32>
    "tpu.trace_stop"() : () -> ()
    %94 = vector.broadcast %5 : vector<2x1x8xf32> to vector<2x8x8xf32>
    %95 = arith.addf %93, %94 : vector<2x8x8xf32>
    %cst_29 = arith.constant dense<0xFF800000> : vector<2x8xf32>
    %96 = vector.multi_reduction <maximumf>, %95, %cst_29 [2] : vector<2x8x8xf32> to vector<2x8xf32>
    %97 = vector.shape_cast %96 : vector<2x8xf32> to vector<2x8x1xf32>
    %98 = vector.broadcast %97 : vector<2x8x1xf32> to vector<2x8x8xf32>
    %99 = arith.subf %95, %98 : vector<2x8x8xf32>
    %100 = math.exp %99 : vector<2x8x8xf32>
    %cst_30 = arith.constant dense<0.000000e+00> : vector<2x8xf32>
    %101 = vector.multi_reduction <add>, %100, %cst_30 [2] : vector<2x8x8xf32> to vector<2x8xf32>
    %102 = vector.shape_cast %101 : vector<2x8xf32> to vector<2x8x1xf32>
    %103 = tpu.reciprocal %102 : vector<2x8x1xf32> -> vector<2x8x1xf32>
    %104 = vector.broadcast %103 : vector<2x8x1xf32> to vector<2x8x8xf32>
    %105 = arith.mulf %100, %104 : vector<2x8x8xf32>
    %106 = vector.extract_strided_slice %56 {offsets = [0, 0, 16], sizes = [2, 8, 8], strides = [1, 1, 1]} : vector<2x8x32xf32> to vector<2x8x8xf32>
    "tpu.trace_start"() <{level = 10 : i32, message = "bqk,bkd->bqd"}> : () -> ()
    %cst_31 = arith.constant dense<0.000000e+00> : vector<2x8x8xf32>
    %107 = tpu.matmul %105, %106, %cst_31 {dimension_numbers = #tpu.dot_dimension_numbers<[2], [1], [1], [2], [0, 0, 0, 1, 1, 2], [0], [0]>} : vector<2x8x8xf32>, vector<2x8x8xf32>, vector<2x8x8xf32> -> vector<2x8x8xf32>
    "tpu.trace_stop"() : () -> ()
    %108 = vector.extract_strided_slice %48 {offsets = [0, 0, 24], sizes = [2, 8, 8], strides = [1, 1, 1]} : vector<2x8x32xf32> to vector<2x8x8xf32>
    %109 = vector.extract_strided_slice %52 {offsets = [0, 0, 24], sizes = [2, 8, 8], strides = [1, 1, 1]} : vector<2x8x32xf32> to vector<2x8x8xf32>
    "tpu.trace_start"() <{level = 10 : i32, message = "bqd,bkd->bqk"}> : () -> ()
    %cst_32 = arith.constant dense<0.000000e+00> : vector<2x8x8xf32>
    %110 = tpu.matmul %108, %109, %cst_32 {dimension_numbers = #tpu.dot_dimension_numbers<[2], [2], [1], [1], [0, 0, 0, 1, 1, 1], [0], [0]>} : vector<2x8x8xf32>, vector<2x8x8xf32>, vector<2x8x8xf32> -> vector<2x8x8xf32>
    "tpu.trace_stop"() : () -> ()
    %111 = vector.broadcast %5 : vector<2x1x8xf32> to vector<2x8x8xf32>
    %112 = arith.addf %110, %111 : vector<2x8x8xf32>
    %cst_33 = arith.constant dense<0xFF800000> : vector<2x8xf32>
    %113 = vector.multi_reduction <maximumf>, %112, %cst_33 [2] : vector<2x8x8xf32> to vector<2x8xf32>
    %114 = vector.shape_cast %113 : vector<2x8xf32> to vector<2x8x1xf32>
    %115 = vector.broadcast %114 : vector<2x8x1xf32> to vector<2x8x8xf32>
    %116 = arith.subf %112, %115 : vector<2x8x8xf32>
    %117 = math.exp %116 : vector<2x8x8xf32>
    %cst_34 = arith.constant dense<0.000000e+00> : vector<2x8xf32>
    %118 = vector.multi_reduction <add>, %117, %cst_34 [2] : vector<2x8x8xf32> to vector<2x8xf32>
    %119 = vector.shape_cast %118 : vector<2x8xf32> to vector<2x8x1xf32>
    %120 = tpu.reciprocal %119 : vector<2x8x1xf32> -> vector<2x8x1xf32>
    %121 = vector.broadcast %120 : vector<2x8x1xf32> to vector<2x8x8xf32>
    %122 = arith.mulf %117, %121 : vector<2x8x8xf32>
    %123 = vector.extract_strided_slice %56 {offsets = [0, 0, 24], sizes = [2, 8, 8], strides = [1, 1, 1]} : vector<2x8x32xf32> to vector<2x8x8xf32>
    "tpu.trace_start"() <{level = 10 : i32, message = "bqk,bkd->bqd"}> : () -> ()
    %cst_35 = arith.constant dense<0.000000e+00> : vector<2x8x8xf32>
    %124 = tpu.matmul %122, %123, %cst_35 {dimension_numbers = #tpu.dot_dimension_numbers<[2], [1], [1], [2], [0, 0, 0, 1, 1, 2], [0], [0]>} : vector<2x8x8xf32>, vector<2x8x8xf32>, vector<2x8x8xf32> -> vector<2x8x8xf32>
    "tpu.trace_stop"() : () -> ()
    %125 = tpu.concatenate %73, %90, %107, %124 in 2 : vector<2x8x8xf32>, vector<2x8x8xf32>, vector<2x8x8xf32>, vector<2x8x8xf32> -> vector<2x8x32xf32>
    %126 = vector.shape_cast %125 : vector<2x8x32xf32> to vector<16x32xf32>
    %c0_36 = arith.constant 0 : index
    %c0_37 = arith.constant 0 : index
    %c0_38 = arith.constant 0 : index
    %127 = vector.load %arg5[%c0_36, %c0_37, %c0_38] : memref<1x32x32xf32, #tpu.memory_space<vmem>>, vector<1x32x32xf32>
    %128 = vector.shape_cast %127 : vector<1x32x32xf32> to vector<32x32xf32>
    %cst_39 = arith.constant dense<0.000000e+00> : vector<16x32xf32>
    %129 = tpu.matmul %126, %128, %cst_39 {dimension_numbers = #tpu.dot_dimension_numbers<[1], [0], [0], [1], [0, 0, 1, 1], [], []>} : vector<16x32xf32>, vector<32x32xf32>, vector<16x32xf32> -> vector<16x32xf32>
    %130 = arith.addf %4, %129 : vector<16x32xf32>
    %131 = vector.broadcast %15 : vector<1x32xf32> to vector<16x32xf32>
    %132 = arith.addf %130, %131 : vector<16x32xf32>
    %cst_40 = arith.constant dense<0.000000e+00> : vector<16xf32>
    %133 = vector.multi_reduction <add>, %132, %cst_40 [1] : vector<16x32xf32> to vector<16xf32>
    %134 = vector.shape_cast %133 : vector<16xf32> to vector<16x1xf32>
    %cst_41 = arith.constant 3.200000e+01 : f32
    %135 = vector.broadcast %cst_41 : f32 to vector<16x1xf32>
    %136 = arith.divf %134, %135 : vector<16x1xf32>
    %137 = vector.broadcast %136 : vector<16x1xf32> to vector<16x32xf32>
    %138 = arith.subf %132, %137 : vector<16x32xf32>
    %139 = arith.mulf %138, %138 : vector<16x32xf32>
    %cst_42 = arith.constant dense<0.000000e+00> : vector<16xf32>
    %140 = vector.multi_reduction <add>, %139, %cst_42 [1] : vector<16x32xf32> to vector<16xf32>
    %141 = vector.shape_cast %140 : vector<16xf32> to vector<16x1xf32>
    %cst_43 = arith.constant 0.0322580636 : f32
    %142 = vector.broadcast %cst_43 : f32 to vector<16x1xf32>
    %143 = arith.mulf %141, %142 : vector<16x1xf32>
    %144 = math.sqrt %143 : vector<16x1xf32>
    %cst_44 = arith.constant 9.99999997E-7 : f32
    %145 = vector.broadcast %cst_44 : f32 to vector<16x1xf32>
    %146 = arith.addf %144, %145 : vector<16x1xf32>
    %147 = tpu.reciprocal %146 : vector<16x1xf32> -> vector<16x1xf32>
    %148 = vector.broadcast %136 : vector<16x1xf32> to vector<16x32xf32>
    %149 = arith.subf %132, %148 : vector<16x32xf32>
    %150 = vector.broadcast %10 : vector<1x32xf32> to vector<16x32xf32>
    %151 = arith.mulf %150, %149 : vector<16x32xf32>
    %152 = vector.broadcast %147 : vector<16x1xf32> to vector<16x32xf32>
    %153 = arith.mulf %151, %152 : vector<16x32xf32>
    %154 = vector.broadcast %11 : vector<1x32xf32> to vector<16x32xf32>
    %155 = arith.addf %153, %154 : vector<16x32xf32>
    %c0_45 = arith.constant 0 : index
    %c0_46 = arith.constant 0 : index
    %c0_47 = arith.constant 0 : index
    %156 = vector.load %arg6[%c0_45, %c0_46, %c0_47] : memref<1x32x64xf32, #tpu.memory_space<vmem>>, vector<1x32x64xf32>
    %157 = vector.shape_cast %156 : vector<1x32x64xf32> to vector<32x64xf32>
    %cst_48 = arith.constant dense<0.000000e+00> : vector<16x64xf32>
    %158 = tpu.matmul %155, %157, %cst_48 {dimension_numbers = #tpu.dot_dimension_numbers<[1], [0], [0], [1], [0, 0, 1, 1], [], []>} : vector<16x32xf32>, vector<32x64xf32>, vector<16x64xf32> -> vector<16x64xf32>
    %159 = vector.broadcast %18 : vector<1x64xf32> to vector<16x64xf32>
    %160 = arith.addf %158, %159 : vector<16x64xf32>
    %cst_49 = arith.constant 0.000000e+00 : f32
    %161 = vector.broadcast %cst_49 : f32 to vector<16x64xf32>
    %162 = arith.maximumf %160, %161 : vector<16x64xf32>
    %c0_50 = arith.constant 0 : index
    %c0_51 = arith.constant 0 : index
    %c0_52 = arith.constant 0 : index
    %163 = vector.load %arg7[%c0_50, %c0_51, %c0_52] : memref<1x64x32xf32, #tpu.memory_space<vmem>>, vector<1x64x32xf32>
    %164 = vector.shape_cast %163 : vector<1x64x32xf32> to vector<64x32xf32>
    %cst_53 = arith.constant dense<0.000000e+00> : vector<16x32xf32>
    %165 = tpu.matmul %162, %164, %cst_53 {dimension_numbers = #tpu.dot_dimension_numbers<[1], [0], [0], [1], [0, 0, 1, 1], [], []>} : vector<16x64xf32>, vector<64x32xf32>, vector<16x32xf32> -> vector<16x32xf32>
    %166 = arith.addf %132, %165 : vector<16x32xf32>
    %167 = vector.broadcast %16 : vector<1x32xf32> to vector<16x32xf32>
    %168 = arith.addf %166, %167 : vector<16x32xf32>
    %169 = vector.shape_cast %168 : vector<16x32xf32> to vector<2x8x32xf32>
    %c0_54 = arith.constant 0 : index
    %c0_55 = arith.constant 0 : index
    %c0_56 = arith.constant 0 : index
    %170 = vector.load %arg12[%c0_54, %c0_55, %c0_56] : memref<2x8x32xf32, #tpu.memory_space<vmem>>, vector<2x8x32xf32>
    tpu.vector_store %arg12[%c0_54, %c0_55, %c0_56], %169 {strides = array<i32>} : memref<2x8x32xf32, #tpu.memory_space<vmem>>, vector<2x8x32xf32>,
    %c1_i32 = arith.constant 1 : i32
    %171 = arith.cmpi eq, %arg1, %c1_i32 : i32
    %172 = arith.extui %171 : i1 to i32
    %c0_i32_57 = arith.constant 0 : i32
    %173 = arith.cmpi ne, %172, %c0_i32_57 : i32
    scf.if %173 {
      %c0_58 = arith.constant 0 : index
      %c0_59 = arith.constant 0 : index
      %174 = vector.load %arg10[%c0_58, %c0_59] : memref<2x32xf32, #tpu.memory_space<vmem>>, vector<2x32xf32>
      %175 = vector.extract_strided_slice %174 {offsets = [0, 0], sizes = [1, 32], strides = [1, 1]} : vector<2x32xf32> to vector<1x32xf32>
      %176 = vector.extract_strided_slice %174 {offsets = [1, 0], sizes = [1, 32], strides = [1, 1]} : vector<2x32xf32> to vector<1x32xf32>
      %cst_60 = arith.constant dense<0.000000e+00> : vector<16xf32>
      %177 = vector.multi_reduction <add>, %168, %cst_60 [1] : vector<16x32xf32> to vector<16xf32>
      %178 = vector.shape_cast %177 : vector<16xf32> to vector<16x1xf32>
      %cst_61 = arith.constant 3.200000e+01 : f32
      %179 = vector.broadcast %cst_61 : f32 to vector<16x1xf32>
      %180 = arith.divf %178, %179 : vector<16x1xf32>
      %181 = vector.broadcast %180 : vector<16x1xf32> to vector<16x32xf32>
      %182 = arith.subf %168, %181 : vector<16x32xf32>
      %183 = arith.mulf %182, %182 : vector<16x32xf32>
      %cst_62 = arith.constant dense<0.000000e+00> : vector<16xf32>
      %184 = vector.multi_reduction <add>, %183, %cst_62 [1] : vector<16x32xf32> to vector<16xf32>
      %185 = vector.shape_cast %184 : vector<16xf32> to vector<16x1xf32>
      %cst_63 = arith.constant 0.0322580636 : f32
      %186 = vector.broadcast %cst_63 : f32 to vector<16x1xf32>
      %187 = arith.mulf %185, %186 : vector<16x1xf32>
      %188 = math.sqrt %187 : vector<16x1xf32>
      %cst_64 = arith.constant 9.99999997E-7 : f32
      %189 = vector.broadcast %cst_64 : f32 to vector<16x1xf32>
      %190 = arith.addf %188, %189 : vector<16x1xf32>
      %191 = tpu.reciprocal %190 : vector<16x1xf32> -> vector<16x1xf32>
      %192 = vector.broadcast %180 : vector<16x1xf32> to vector<16x32xf32>
      %193 = arith.subf %168, %192 : vector<16x32xf32>
      %194 = vector.broadcast %175 : vector<1x32xf32> to vector<16x32xf32>
      %195 = arith.mulf %194, %193 : vector<16x32xf32>
      %196 = vector.broadcast %191 : vector<16x1xf32> to vector<16x32xf32>
      %197 = arith.mulf %195, %196 : vector<16x32xf32>
      %198 = vector.broadcast %176 : vector<1x32xf32> to vector<16x32xf32>
      %199 = arith.addf %197, %198 : vector<16x32xf32>
      %200 = vector.shape_cast %199 : vector<16x32xf32> to vector<2x8x32xf32>
      %c0_65 = arith.constant 0 : index
      %c0_66 = arith.constant 0 : index
      %c0_67 = arith.constant 0 : index
      %201 = vector.load %arg11[%c0_65, %c0_66, %c0_67] : memref<2x8x32xf32, #tpu.memory_space<vmem>>, vector<2x8x32xf32>
      tpu.vector_store %arg11[%c0_65, %c0_66, %c0_67], %200 {strides = array<i32>} : memref<2x8x32xf32, #tpu.memory_space<vmem>>, vector<2x8x32xf32>,
    } else {
    }
    return
  }
  func.func @transform_0(%arg0: i32, %arg1: i32) -> (i32, i32, i32) {
    %c0_i32 = arith.constant 0 : i32
    %c0_i32_0 = arith.constant 0 : i32
    %c0_i32_1 = arith.constant 0 : i32
    return %arg0, %c0_i32, %c0_i32_0 : i32, i32, i32
  }
  func.func @transform_1(%arg0: i32, %arg1: i32) -> (i32, i32, i32) {
    %c0_i32 = arith.constant 0 : i32
    %c0_i32_0 = arith.constant 0 : i32
    %c0_i32_1 = arith.constant 0 : i32
    return %arg0, %c0_i32, %c0_i32_0 : i32, i32, i32
  }
  func.func @transform_2(%arg0: i32, %arg1: i32) -> (i32, i32, i32) {
    %c0_i32 = arith.constant 0 : i32
    %c0_i32_0 = arith.constant 0 : i32
    %c0_i32_1 = arith.constant 0 : i32
    return %arg1, %c0_i32, %c0_i32_0 : i32, i32, i32
  }
  func.func @transform_3(%arg0: i32, %arg1: i32) -> (i32, i32, i32) {
    %c0_i32 = arith.constant 0 : i32
    %c0_i32_0 = arith.constant 0 : i32
    %c0_i32_1 = arith.constant 0 : i32
    return %arg1, %c0_i32, %c0_i32_0 : i32, i32, i32
  }
  func.func @transform_4(%arg0: i32, %arg1: i32) -> (i32, i32, i32) {
    %c0_i32 = arith.constant 0 : i32
    %c0_i32_0 = arith.constant 0 : i32
    %c0_i32_1 = arith.constant 0 : i32
    return %arg1, %c0_i32, %c0_i32_0 : i32, i32, i32
  }
  func.func @transform_5(%arg0: i32, %arg1: i32) -> (i32, i32, i32) {
    %c0_i32 = arith.constant 0 : i32
    %c0_i32_0 = arith.constant 0 : i32
    %c0_i32_1 = arith.constant 0 : i32
    return %arg1, %c0_i32, %c0_i32_0 : i32, i32, i32
  }
  func.func @transform_6(%arg0: i32, %arg1: i32) -> (i32, i32, i32) {
    %c0_i32 = arith.constant 0 : i32
    %c0_i32_0 = arith.constant 0 : i32
    %c0_i32_1 = arith.constant 0 : i32
    return %arg1, %c0_i32, %c0_i32_0 : i32, i32, i32
  }
  func.func @transform_7(%arg0: i32, %arg1: i32) -> (i32, i32, i32) {
    %c0_i32 = arith.constant 0 : i32
    %c0_i32_0 = arith.constant 0 : i32
    %c0_i32_1 = arith.constant 0 : i32
    return %arg1, %c0_i32, %c0_i32_0 : i32, i32, i32
  }
  func.func @transform_8(%arg0: i32, %arg1: i32) -> (i32, i32) {
    %c0_i32 = arith.constant 0 : i32
    %c0_i32_0 = arith.constant 0 : i32
    %c0_i32_1 = arith.constant 0 : i32
    return %c0_i32, %c0_i32_0 : i32, i32
  }
  func.func @transform_9(%arg0: i32, %arg1: i32) -> (i32, i32, i32) {
    %c0_i32 = arith.constant 0 : i32
    %c0_i32_0 = arith.constant 0 : i32
    %c0_i32_1 = arith.constant 0 : i32
    return %arg0, %c0_i32, %c0_i32_0 : i32, i32, i32
  }
}

</mosaic_0001>

<llo_original>
// kernel: tpu_custom_call.1
$region0: #{tpu_custom_call.1}
  #allocation0 [shape = 'u32[]', space=smem, size = 0x4, offset = 0x4, fixed_abs, tag = 'smem constant byte address 0x4 - core index']
  #allocation1 [shape = 'u32[144,128]{1,0:T(1,128)}', space=vmem, size = 0x12000, scoped, tag = 'internal scratch']
  #allocation2 [shape = 'f32[2,8,32]{2,1,0:T(8,128)}', space=vmem, size = 0x2000, scoped, tag = 'scratch operand']
  %s0 = inlined_call_operand.vmem [shape: f32[2,8,32], index: 0, kind: input, shape index: {}]
  %s1 = inlined_call_operand.vmem [shape: f32[2,1,8], index: 1, kind: input, shape index: {}]
  %s2 = inlined_call_operand.vmem [shape: f32[2,32,96], index: 2, kind: input, shape index: {}]
  %s3 = inlined_call_operand.vmem [shape: f32[2,32,32], index: 3, kind: input, shape index: {}]
  %s4 = inlined_call_operand.vmem [shape: f32[2,32,64], index: 4, kind: input, shape index: {}]
  %s5 = inlined_call_operand.vmem [shape: f32[2,64,32], index: 5, kind: input, shape index: {}]
  %s6 = inlined_call_operand.vmem [shape: f32[2,9,32], index: 6, kind: input, shape index: {}]
  %s7 = inlined_call_operand.vmem [shape: f32[2,1,64], index: 7, kind: input, shape index: {}]
  %s8 = inlined_call_operand.vmem [shape: f32[2,32], index: 8, kind: input, shape index: {}]
  %s9 = inlined_call_operand.hbm [shape: f32[2,8,32], index: 9, kind: output, shape index: {}]
  %s10 = sld [smem:[#allocation0]]
  $region77: #{tpu_custom_call.1} parent=0
    _
  %s12 = ssub.s32 1, %s10
  %s13 = scalar_select 0, %s12, %s10
  $region1: #{tpu_custom_call.1} parent=0
    #allocation3 [shape = 'u8[8192]{0}', space=vmem, size = 0x2000, scoped, tag = 'output window, operand 0, single buffered']
    #allocation4 [shape = 's32[2]{0}', space=sflag, size = 0x8, scoped, tag = 'scoped memory for tpu_custom_call.1']
    %14 = vsyncpa [#allocation4], 0
    loop: start=0, step=1, limit=4
    $region2: #{tpu_custom_call.1} parent=1 // loop_pre_header
      _
    $region3: #{tpu_custom_call.1} parent=1 // loop_header
      %s16 = sphi 0, %s20
      %p17 = scmp.ge.s32.totalorder %s16, 4
      %s23 = sphi 0, %s35
      %s24 = sphi 0, %s31
      %s25 = sphi 0, %s23
      %s26 = sphi 0, %s24
      %s27 = sphi 0, %s25
      %s28 = sphi 0, %s26
      %s38 = sphi 0, %s40
      %s41 = sphi 0, %s38
      %s42 = sphi 0, %s41
      %s58 = sphi 0, %s42
      %s64 = sphi 0, %s66
      %s67 = sphi 0, %s64
      %s68 = sphi 0, %s67
      %s84 = sphi 0, %s68
      %s90 = sphi 0, %s92
      %s93 = sphi 0, %s90
      %s94 = sphi 0, %s93
      %s110 = sphi 0, %s94
      %s116 = sphi 0, %s118
      %s119 = sphi 0, %s116
      %s120 = sphi 0, %s119
      %s136 = sphi 0, %s120
      %s142 = sphi 0, %s144
      %s145 = sphi 0, %s142
      %s146 = sphi 0, %s145
      %s162 = sphi 0, %s146
      %s168 = sphi 0, %s170
      %s171 = sphi 0, %s168
      %s172 = sphi 0, %s171
      %s188 = sphi 0, %s172
      %s194 = sphi 0, %s196
      %s197 = sphi 0, %s194
      %s198 = sphi 0, %s197
      %s214 = sphi 0, %s198
      %s220 = sphi 0, %s222
      %s223 = sphi 0, %s220
      %s224 = sphi 0, %s223
      %s240 = sphi 0, %s224
      %s244 = sphi 0, %s244
      %s246 = sphi 0, %s244
      %s247 = sphi 0, %s246
      %s261 = sphi 0, %s247
      %s267 = sphi 0, %s269
      %s270 = sphi 0, %s267
      %s271 = sphi 0, %s270
      %s287 = sphi 0, %s271
    $region4: #{tpu_custom_call.1} parent=1 // loop_header_branch
      %19 = sbr.rel (%p17) target = $region8
    $region5: #{tpu_custom_call.1} parent=1 // loop_body
      %s21 = ssub.s32 %s16, 1
      %s22 = ssub.s32 %s16, 2
      %s29 = sadd.s32 1, %s24
      %p30 = scmp.ge.s32.totalorder %s29, 2
      %s31 = scalar_select %p30, 0, %s29
      %s32 = sadd.s32 1, %s23
      %s33 = scalar_select %p30, %s32, %s23
      %p34 = scmp.ge.s32.totalorder %s33, 1
      %s35 = scalar_select %p34, 0, %s33
      %s36 = ssub.s32 %s23, %s35
      %p37 = scmp.eq.s32.totalorder %s36, 0
      %s39 = sadd.s32 %s38, 1
      %s40 = scalar_select %p37, %s38, %s39
      %p43 = pneg %p37
      %p44 = scmp.eq.s32.totalorder %s16, 1
      %p45 = por %p43, %p44
      %p46 = scmp.ne.s32.totalorder %s38, %s41
      %p47 = scmp.eq.s32.totalorder %s16, 0
      %p48 = por %p46, %p47
      %p49 = scmp.ne.s32.totalorder %s38, %s41
      %p50 = scmp.eq.s32.totalorder %s21, 1
      %p51 = por %p49, %p50
      %p52 = scmp.ne.s32.totalorder %s41, %s42
      %p53 = scmp.eq.s32.totalorder %s21, 0
      %p54 = por %p52, %p53
      %p55 = scmp.ne.s32.totalorder %s41, %s42
      %p56 = scmp.eq.s32.totalorder %s22, 1
      %p57 = por %p55, %p56
      %p59 = scmp.ne.s32.totalorder %s42, %s58
      %p60 = scmp.eq.s32.totalorder %s22, 0
      %p61 = por %p59, %p60
      %s62 = ssub.s32 %s23, %s35
      %p63 = scmp.eq.s32.totalorder %s62, 0
      %s65 = sadd.s32 %s64, 1
      %s66 = scalar_select %p63, %s64, %s65
      %p69 = pneg %p63
      %p70 = scmp.eq.s32.totalorder %s16, 1
      %p71 = por %p69, %p70
      %p72 = scmp.ne.s32.totalorder %s64, %s67
      %p73 = scmp.eq.s32.totalorder %s16, 0
      %p74 = por %p72, %p73
      %p75 = scmp.ne.s32.totalorder %s64, %s67
      %p76 = scmp.eq.s32.totalorder %s21, 1
      %p77 = por %p75, %p76
      %p78 = scmp.ne.s32.totalorder %s67, %s68
      %p79 = scmp.eq.s32.totalorder %s21, 0
      %p80 = por %p78, %p79
      %p81 = scmp.ne.s32.totalorder %s67, %s68
      %p82 = scmp.eq.s32.totalorder %s22, 1
      %p83 = por %p81, %p82
      %p85 = scmp.ne.s32.totalorder %s68, %s84
      %p86 = scmp.eq.s32.totalorder %s22, 0
      %p87 = por %p85, %p86
      %s88 = ssub.s32 %s24, %s31
      %p89 = scmp.eq.s32.totalorder %s88, 0
      %s91 = sadd.s32 %s90, 1
      %s92 = scalar_select %p89, %s90, %s91
      %p95 = pneg %p89
      %p96 = scmp.eq.s32.totalorder %s16, 1
      %p97 = por %p95, %p96
      %p98 = scmp.ne.s32.totalorder %s90, %s93
      %p99 = scmp.eq.s32.totalorder %s16, 0
      %p100 = por %p98, %p99
      %p101 = scmp.ne.s32.totalorder %s90, %s93
      %p102 = scmp.eq.s32.totalorder %s21, 1
      %p103 = por %p101, %p102
      %p104 = scmp.ne.s32.totalorder %s93, %s94
      %p105 = scmp.eq.s32.totalorder %s21, 0
      %p106 = por %p104, %p105
      %p107 = scmp.ne.s32.totalorder %s93, %s94
      %p108 = scmp.eq.s32.totalorder %s22, 1
      %p109 = por %p107, %p108
      %p111 = scmp.ne.s32.totalorder %s94, %s110
      %p112 = scmp.eq.s32.totalorder %s22, 0
      %p113 = por %p111, %p112
      %s114 = ssub.s32 %s24, %s31
      %p115 = scmp.eq.s32.totalorder %s114, 0
      %s117 = sadd.s32 %s116, 1
      %s118 = scalar_select %p115, %s116, %s117
      %p121 = pneg %p115
      %p122 = scmp.eq.s32.totalorder %s16, 1
      %p123 = por %p121, %p122
      %p124 = scmp.ne.s32.totalorder %s116, %s119
      %p125 = scmp.eq.s32.totalorder %s16, 0
      %p126 = por %p124, %p125
      %p127 = scmp.ne.s32.totalorder %s116, %s119
      %p128 = scmp.eq.s32.totalorder %s21, 1
      %p129 = por %p127, %p128
      %p130 = scmp.ne.s32.totalorder %s119, %s120
      %p131 = scmp.eq.s32.totalorder %s21, 0
      %p132 = por %p130, %p131
      %p133 = scmp.ne.s32.totalorder %s119, %s120
      %p134 = scmp.eq.s32.totalorder %s22, 1
      %p135 = por %p133, %p134
      %p137 = scmp.ne.s32.totalorder %s120, %s136
      %p138 = scmp.eq.s32.totalorder %s22, 0
      %p139 = por %p137, %p138
      %s140 = ssub.s32 %s24, %s31
      %p141 = scmp.eq.s32.totalorder %s140, 0
      %s143 = sadd.s32 %s142, 1
      %s144 = scalar_select %p141, %s142, %s143
      %p147 = pneg %p141
      %p148 = scmp.eq.s32.totalorder %s16, 1
      %p149 = por %p147, %p148
      %p150 = scmp.ne.s32.totalorder %s142, %s145
      %p151 = scmp.eq.s32.totalorder %s16, 0
      %p152 = por %p150, %p151
      %p153 = scmp.ne.s32.totalorder %s142, %s145
      %p154 = scmp.eq.s32.totalorder %s21, 1
      %p155 = por %p153, %p154
      %p156 = scmp.ne.s32.totalorder %s145, %s146
      %p157 = scmp.eq.s32.totalorder %s21, 0
      %p158 = por %p156, %p157
      %p159 = scmp.ne.s32.totalorder %s145, %s146
      %p160 = scmp.eq.s32.totalorder %s22, 1
      %p161 = por %p159, %p160
      %p163 = scmp.ne.s32.totalorder %s146, %s162
      %p164 = scmp.eq.s32.totalorder %s22, 0
      %p165 = por %p163, %p164
      %s166 = ssub.s32 %s24, %s31
      %p167 = scmp.eq.s32.totalorder %s166, 0
      %s169 = sadd.s32 %s168, 1
      %s170 = scalar_select %p167, %s168, %s169
      %p173 = pneg %p167
      %p174 = scmp.eq.s32.totalorder %s16, 1
      %p175 = por %p173, %p174
      %p176 = scmp.ne.s32.totalorder %s168, %s171
      %p177 = scmp.eq.s32.totalorder %s16, 0
      %p178 = por %p176, %p177
      %p179 = scmp.ne.s32.totalorder %s168, %s171
      %p180 = scmp.eq.s32.totalorder %s21, 1
      %p181 = por %p179, %p180
      %p182 = scmp.ne.s32.totalorder %s171, %s172
      %p183 = scmp.eq.s32.totalorder %s21, 0
      %p184 = por %p182, %p183
      %p185 = scmp.ne.s32.totalorder %s171, %s172
      %p186 = scmp.eq.s32.totalorder %s22, 1
      %p187 = por %p185, %p186
      %p189 = scmp.ne.s32.totalorder %s172, %s188
      %p190 = scmp.eq.s32.totalorder %s22, 0
      %p191 = por %p189, %p190
      %s192 = ssub.s32 %s24, %s31
      %p193 = scmp.eq.s32.totalorder %s192, 0
      %s195 = sadd.s32 %s194, 1
      %s196 = scalar_select %p193, %s194, %s195
      %p199 = pneg %p193
      %p200 = scmp.eq.s32.totalorder %s16, 1
      %p201 = por %p199, %p200
      %p202 = scmp.ne.s32.totalorder %s194, %s197
      %p203 = scmp.eq.s32.totalorder %s16, 0
      %p204 = por %p202, %p203
      %p205 = scmp.ne.s32.totalorder %s194, %s197
      %p206 = scmp.eq.s32.totalorder %s21, 1
      %p207 = por %p205, %p206
      %p208 = scmp.ne.s32.totalorder %s197, %s198
      %p209 = scmp.eq.s32.totalorder %s21, 0
      %p210 = por %p208, %p209
      %p211 = scmp.ne.s32.totalorder %s197, %s198
      %p212 = scmp.eq.s32.totalorder %s22, 1
      %p213 = por %p211, %p212
      %p215 = scmp.ne.s32.totalorder %s198, %s214
      %p216 = scmp.eq.s32.totalorder %s22, 0
      %p217 = por %p215, %p216
      %s218 = ssub.s32 %s24, %s31
      %p219 = scmp.eq.s32.totalorder %s218, 0
      %s221 = sadd.s32 %s220, 1
      %s222 = scalar_select %p219, %s220, %s221
      %p225 = pneg %p219
      %p226 = scmp.eq.s32.totalorder %s16, 1
      %p227 = por %p225, %p226
      %p228 = scmp.ne.s32.totalorder %s220, %s223
      %p229 = scmp.eq.s32.totalorder %s16, 0
      %p230 = por %p228, %p229
      %p231 = scmp.ne.s32.totalorder %s220, %s223
      %p232 = scmp.eq.s32.totalorder %s21, 1
      %p233 = por %p231, %p232
      %p234 = scmp.ne.s32.totalorder %s223, %s224
      %p235 = scmp.eq.s32.totalorder %s21, 0
      %p236 = por %p234, %p235
      %p237 = scmp.ne.s32.totalorder %s223, %s224
      %p238 = scmp.eq.s32.totalorder %s22, 1
      %p239 = por %p237, %p238
      %p241 = scmp.ne.s32.totalorder %s224, %s240
      %p242 = scmp.eq.s32.totalorder %s22, 0
      %p243 = por %p241, %p242
      %s245 = sadd.s32 %s244, 1
      %p248 = scmp.eq.s32.totalorder %s16, 1
      %p249 = scmp.ne.s32.totalorder %s244, %s246
      %p250 = scmp.eq.s32.totalorder %s16, 0
      %p251 = por %p249, %p250
      %p252 = scmp.ne.s32.totalorder %s244, %s246
      %p253 = scmp.eq.s32.totalorder %s21, 1
      %p254 = por %p252, %p253
      %p255 = scmp.ne.s32.totalorder %s246, %s247
      %p256 = scmp.eq.s32.totalorder %s21, 0
      %p257 = por %p255, %p256
      %p258 = scmp.ne.s32.totalorder %s246, %s247
      %p259 = scmp.eq.s32.totalorder %s22, 1
      %p260 = por %p258, %p259
      %p262 = scmp.ne.s32.totalorder %s247, %s261
      %p263 = scmp.eq.s32.totalorder %s22, 0
      %p264 = por %p262, %p263
      %s265 = ssub.s32 %s23, %s35
      %p266 = scmp.eq.s32.totalorder %s265, 0
      %s268 = sadd.s32 %s267, 1
      %s269 = scalar_select %p266, %s267, %s268
      %p272 = pneg %p266
      %p273 = scmp.eq.s32.totalorder %s16, 1
      %p274 = por %p272, %p273
      %p275 = scmp.ne.s32.totalorder %s267, %s270
      %p276 = scmp.eq.s32.totalorder %s16, 0
      %p277 = por %p275, %p276
      %p278 = scmp.ne.s32.totalorder %s267, %s270
      %p279 = scmp.eq.s32.totalorder %s21, 1
      %p280 = por %p278, %p279
      %p281 = scmp.ne.s32.totalorder %s270, %s271
      %p282 = scmp.eq.s32.totalorder %s21, 0
      %p283 = por %p281, %p282
      %p284 = scmp.ne.s32.totalorder %s270, %s271
      %p285 = scmp.eq.s32.totalorder %s22, 1
      %p286 = por %p284, %p285
      %p288 = scmp.ne.s32.totalorder %s271, %s287
      %p289 = scmp.eq.s32.totalorder %s22, 0
      %p290 = por %p288, %p289
      %p291 = scmp.le.s32.totalorder 1, %s16
      %p292 = scmp.lt.s32.totalorder %s16, 3
      %p293 = pnand %p291, %p292
      %p294 = pneg %p293
      // Predicated region
      $region9: #{tpu_custom_call.1} parent=5 // pred_check
        _
      $region10: #{tpu_custom_call.1} parent=5 // pred_check_branch
        %296 = sbr.rel (%p293) target = $region12
      $region11: #{tpu_custom_call.1} parent=5 // pred_region
        %s297 = ssub.s32 %s16, 1
        // Predicated region
        $region13: #{tpu_custom_call.1} parent=11 // pred_check
          %p298 = pneg %p54
        $region14: #{tpu_custom_call.1} parent=11 // pred_check_branch
          %300 = sbr.rel (%p298) target = $region16
        $region15: #{tpu_custom_call.1} parent=11 // pred_region
          %s301 = smul.u32 2, %s25
          %p302 = scmp.lt.s32.totalorder %s301, 1
          %s303 = scalar_select %p302, %s301, 1
          %s304 = smul.addr %s303, 8
          %s305 = scalar_lea.vmem %s0, %s304
          %s306 = smul.u32 2, %s25
        $region16: #{tpu_custom_call.1} parent=11 // pred_fallthru
          _
        // Predicated region
        $region17: #{tpu_custom_call.1} parent=11 // pred_check
          %p307 = pneg %p80
        $region18: #{tpu_custom_call.1} parent=11 // pred_check_branch
          %309 = sbr.rel (%p307) target = $region20
        $region19: #{tpu_custom_call.1} parent=11 // pred_region
          %s310 = smul.u32 2, %s25
          %p311 = scmp.lt.s32.totalorder %s310, 1
          %s312 = scalar_select %p311, %s310, 1
          %s313 = scalar_lea.vmem %s1, %s312
          %s314 = smul.u32 2, %s25
        $region20: #{tpu_custom_call.1} parent=11 // pred_fallthru
          _
        // Predicated region
        $region21: #{tpu_custom_call.1} parent=11 // pred_check
          %p315 = pneg %p257
        $region22: #{tpu_custom_call.1} parent=11 // pred_check_branch
          %317 = sbr.rel (%p315) target = $region24
        $region23: #{tpu_custom_call.1} parent=11 // pred_region
          _
        $region24: #{tpu_custom_call.1} parent=11 // pred_fallthru
          _
      $region12: #{tpu_custom_call.1} parent=5 // pred_fallthru
        _
      %p318 = scmp.lt.s32.totalorder %s16, 2
      // Predicated region
      $region25: #{tpu_custom_call.1} parent=5 // pred_check
        %p319 = pneg %p318
      $region26: #{tpu_custom_call.1} parent=5 // pred_check_branch
        %321 = sbr.rel (%p319) target = $region28
      $region27: #{tpu_custom_call.1} parent=5 // pred_region
        // Predicated region
        $region29: #{tpu_custom_call.1} parent=27 // pred_check
          %p322 = pneg %p100
        $region30: #{tpu_custom_call.1} parent=27 // pred_check_branch
          %324 = sbr.rel (%p322) target = $region32
        $region31: #{tpu_custom_call.1} parent=27 // pred_region
          %p325 = scmp.lt.s32.totalorder %s24, 1
          %s326 = scalar_select %p325, %s24, 1
          %s327 = smul.addr %s326, 4
          %s328 = smul.addr %s327, 8
          %s329 = scalar_lea.vmem %s2, %s328
        $region32: #{tpu_custom_call.1} parent=27 // pred_fallthru
          _
        // Predicated region
        $region33: #{tpu_custom_call.1} parent=27 // pred_check
          %p330 = pneg %p126
        $region34: #{tpu_custom_call.1} parent=27 // pred_check_branch
          %332 = sbr.rel (%p330) target = $region36
        $region35: #{tpu_custom_call.1} parent=27 // pred_region
          %p333 = scmp.lt.s32.totalorder %s24, 1
          %s334 = scalar_select %p333, %s24, 1
          %s335 = smul.addr %s334, 4
          %s336 = smul.addr %s335, 8
          %s337 = scalar_lea.vmem %s3, %s336
        $region36: #{tpu_custom_call.1} parent=27 // pred_fallthru
          _
        // Predicated region
        $region37: #{tpu_custom_call.1} parent=27 // pred_check
          %p338 = pneg %p152
        $region38: #{tpu_custom_call.1} parent=27 // pred_check_branch
          %340 = sbr.rel (%p338) target = $region40
        $region39: #{tpu_custom_call.1} parent=27 // pred_region
          %p341 = scmp.lt.s32.totalorder %s24, 1
          %s342 = scalar_select %p341, %s24, 1
          %s343 = smul.addr %s342, 4
          %s344 = smul.addr %s343, 8
          %s345 = scalar_lea.vmem %s4, %s344
        $region40: #{tpu_custom_call.1} parent=27 // pred_fallthru
          _
        // Predicated region
        $region41: #{tpu_custom_call.1} parent=27 // pred_check
          %p346 = pneg %p178
        $region42: #{tpu_custom_call.1} parent=27 // pred_check_branch
          %348 = sbr.rel (%p346) target = $region44
        $region43: #{tpu_custom_call.1} parent=27 // pred_region
          %p349 = scmp.lt.s32.totalorder %s24, 1
          %s350 = scalar_select %p349, %s24, 1
          %s351 = smul.addr %s350, 8
          %s352 = smul.addr %s351, 8
          %s353 = scalar_lea.vmem %s5, %s352
        $region44: #{tpu_custom_call.1} parent=27 // pred_fallthru
          _
        // Predicated region
        $region45: #{tpu_custom_call.1} parent=27 // pred_check
          %p354 = pneg %p204
        $region46: #{tpu_custom_call.1} parent=27 // pred_check_branch
          %356 = sbr.rel (%p354) target = $region48
        $region47: #{tpu_custom_call.1} parent=27 // pred_region
          %p357 = scmp.lt.s32.totalorder %s24, 1
          %s358 = scalar_select %p357, %s24, 1
          %s359 = smul.addr %s358, 2
          %s360 = smul.addr %s359, 8
          %s361 = scalar_lea.vmem %s6, %s360
        $region48: #{tpu_custom_call.1} parent=27 // pred_fallthru
          _
        // Predicated region
        $region49: #{tpu_custom_call.1} parent=27 // pred_check
          %p362 = pneg %p230
        $region50: #{tpu_custom_call.1} parent=27 // pred_check_branch
          %364 = sbr.rel (%p362) target = $region52
        $region51: #{tpu_custom_call.1} parent=27 // pred_region
          %p365 = scmp.lt.s32.totalorder %s24, 1
          %s366 = scalar_select %p365, %s24, 1
          %s367 = scalar_lea.vmem %s7, %s366
        $region52: #{tpu_custom_call.1} parent=27 // pred_fallthru
          _
      $region28: #{tpu_custom_call.1} parent=5 // pred_fallthru
        _
      %p368 = scmp.le.s32.totalorder 1, %s16
      %p369 = scmp.lt.s32.totalorder %s16, 3
      %p370 = pnand %p368, %p369
      %p371 = pneg %p370
      // Predicated region
      $region53: #{tpu_custom_call.1} parent=5 // pred_check
        _
      $region54: #{tpu_custom_call.1} parent=5 // pred_check_branch
        %373 = sbr.rel (%p370) target = $region56
      $region55: #{tpu_custom_call.1} parent=5 // pred_region
        %s374 = ssub.s32 %s16, 1
        %s375 = smul.u32 2, %s25
        %p376 = scmp.lt.s32.totalorder %s375, 1
        %s377 = scalar_select %p376, %s375, 1
        %s378 = smul.addr %s377, 8
        %s379 = scalar_lea.vmem %s0, %s378
        %p380 = pneg %p54
        %p381 = pneg %p51
        %s382 = smul.u32 2, %s25
        %p383 = scmp.lt.s32.totalorder %s382, 1
        %s384 = scalar_select %p383, %s382, 1
        %s385 = scalar_lea.vmem %s1, %s384
        %p386 = pneg %p80
        %p387 = pneg %p77
        %p388 = scmp.lt.s32.totalorder %s26, 1
        %s389 = scalar_select %p388, %s26, 1
        %s390 = smul.addr %s389, 4
        %s391 = smul.addr %s390, 8
        %s392 = scalar_lea.vmem %s2, %s391
        %p393 = pneg %p106
        %p394 = pneg %p103
        %p395 = scmp.lt.s32.totalorder %s26, 1
        %s396 = scalar_select %p395, %s26, 1
        %s397 = smul.addr %s396, 4
        %s398 = smul.addr %s397, 8
        %s399 = scalar_lea.vmem %s3, %s398
        %p400 = pneg %p132
        %p401 = pneg %p129
        %p402 = scmp.lt.s32.totalorder %s26, 1
        %s403 = scalar_select %p402, %s26, 1
        %s404 = smul.addr %s403, 4
        %s405 = smul.addr %s404, 8
        %s406 = scalar_lea.vmem %s4, %s405
        %p407 = pneg %p158
        %p408 = pneg %p155
        %p409 = scmp.lt.s32.totalorder %s26, 1
        %s410 = scalar_select %p409, %s26, 1
        %s411 = smul.addr %s410, 8
        %s412 = smul.addr %s411, 8
        %s413 = scalar_lea.vmem %s5, %s412
        %p414 = pneg %p184
        %p415 = pneg %p181
        %p416 = scmp.lt.s32.totalorder %s26, 1
        %s417 = scalar_select %p416, %s26, 1
        %s418 = smul.addr %s417, 2
        %s419 = smul.addr %s418, 8
        %s420 = scalar_lea.vmem %s6, %s419
        %p421 = pneg %p210
        %p422 = pneg %p207
        %p423 = scmp.lt.s32.totalorder %s26, 1
        %s424 = scalar_select %p423, %s26, 1
        %s425 = scalar_lea.vmem %s7, %s424
        %p426 = pneg %p236
        %p427 = pneg %p233
        %p428 = pneg %p257
        %p429 = pneg %p254
        %p430 = pneg %p283
        %p431 = pneg %p280
        %s432 = smul.u32 2, %s25
        %p433 = scmp.lt.s32.totalorder %s432, 1
        %s434 = scalar_select %p433, %s432, 1
        %s435 = smul.addr %s434, 8
        %s436 = scalar_lea.vmem %s0, %s435
        %s437 = smul.u32 2, %s25
        %s438 = smul.u32 2, %s25
        %p439 = scmp.lt.s32.totalorder %s438, 1
        %s440 = scalar_select %p439, %s438, 1
        %s441 = scalar_lea.vmem %s1, %s440
        %s442 = smul.u32 2, %s25
        %p443 = scmp.lt.s32.totalorder %s26, 1
        %s444 = scalar_select %p443, %s26, 1
        %s445 = smul.addr %s444, 4
        %s446 = smul.addr %s445, 8
        %s447 = scalar_lea.vmem %s2, %s446
        %p448 = scmp.lt.s32.totalorder %s26, 1
        %s449 = scalar_select %p448, %s26, 1
        %s450 = smul.addr %s449, 4
        %s451 = smul.addr %s450, 8
        %s452 = scalar_lea.vmem %s3, %s451
        %p453 = scmp.lt.s32.totalorder %s26, 1
        %s454 = scalar_select %p453, %s26, 1
        %s455 = smul.addr %s454, 4
        %s456 = smul.addr %s455, 8
        %s457 = scalar_lea.vmem %s4, %s456
        %p458 = scmp.lt.s32.totalorder %s26, 1
        %s459 = scalar_select %p458, %s26, 1
        %s460 = smul.addr %s459, 8
        %s461 = smul.addr %s460, 8
        %s462 = scalar_lea.vmem %s5, %s461
        %p463 = scmp.lt.s32.totalorder %s26, 1
        %s464 = scalar_select %p463, %s26, 1
        %s465 = smul.addr %s464, 2
        %s466 = smul.addr %s465, 8
        %s467 = scalar_lea.vmem %s6, %s466
        %p468 = scmp.lt.s32.totalorder %s26, 1
        %s469 = scalar_select %p468, %s26, 1
        %s470 = scalar_lea.vmem %s7, %s469
        %s471 = smul.u32 2, %s25
        %p472 = scmp.eq.s32.totalorder %s26, 0
        // Predicated region
        $region57: #{tpu_custom_call.1} parent=55 // pred_check
          %p473 = pneg %p472
        $region58: #{tpu_custom_call.1} parent=55 // pred_check_branch
          %475 = sbr.rel (%p473) target = $region60
        $region59: #{tpu_custom_call.1} parent=55 // pred_region
          %v476 = vld [vmem:[%s436] sm:$0xff]
          %v477 = vld [vmem:[%s436 + $0x8] sm:$0xff]
          %vm478 = vcmask 261120
          %479 = vst.msk [vmem:[#allocation2] sm:$0xff] %vm478, %v476
          %480 = vst.msk [vmem:[#allocation2 + $0x8] sm:$0xff] %vm478, %v477
        $region60: #{tpu_custom_call.1} parent=55 // pred_fallthru
          _
        %v481 = vld [vmem:[#allocation2] sm:$0xff]
        %v482 = vld [vmem:[#allocation2 + $0x8] sm:$0xff]
        %v483 = vld [vmem:[%s441] sm:$0x1]
        %v484 = vld [vmem:[%s441 + $0x1] sm:$0x1]
        %v485 = vld [vmem:[%s467] sm:$0xff]
        %v486 = vld [vmem:[%s467 + $0x8] sm:$0x1]
        %v487 = vld [vmem:[%s470] sm:$0x1]
        %vm488 = vcmask 261120
        %v489 = vsel %vm488, %v481, 0.0
        %490 = vadd.xlane.f32.xlu0 %v489
        %v491 = vpop.xlane.xlu0 %490
        %v492 = vsel %vm488, %v482, 0.0
        %493 = vadd.xlane.f32.xlu0 %v492
        %v494 = vpop.xlane.xlu0 %493
        %v495 = vrcp.pop 32.0
        %v496 = vmul.f32 %v491, %v495
        %v497 = vmul.f32 %v494, %v495
        %v498 = vsub.f32 %v481, %v496
        %v499 = vsub.f32 %v482, %v497
        %v500 = vmul.f32 %v498, %v498
        %v501 = vmul.f32 %v499, %v499
        %v502 = vsel %vm488, %v500, 0.0
        %503 = vadd.xlane.f32.xlu0 %v502
        %v504 = vpop.xlane.xlu0 %503
        %v505 = vsel %vm488, %v501, 0.0
        %506 = vadd.xlane.f32.xlu0 %v505
        %v507 = vpop.xlane.xlu0 %506
        %v508 = vmul.f32 %v504, 0.032258064
        %v509 = vmul.f32 %v507, 0.032258064
        %v510 = vrsqrt.pop %v508
        %v511 = vmul.f32 %v508, %v510
        %vm512 = vcmp.eq.f32.partialorder %v508, inf
        %v513 = vsel %vm512, %v508, %v511
        %vm514 = vcmp.eq.f32.partialorder %v508, 0.0
        %v515 = vand.u32 %v508, 2147483648
        %v516 = vsel %vm514, %v515, %v513
        %v517 = vrsqrt.pop %v509
        %v518 = vmul.f32 %v509, %v517
        %vm519 = vcmp.eq.f32.partialorder %v509, inf
        %v520 = vsel %vm519, %v509, %v518
        %vm521 = vcmp.eq.f32.partialorder %v509, 0.0
        %v522 = vand.u32 %v509, 2147483648
        %v523 = vsel %vm521, %v522, %v520
        %v524 = vadd.f32 %v516, 1e-06
        %v525 = vadd.f32 %v523, 1e-06
        %v526 = vrcp.pop %v524
        %v527 = vrcp.pop %v525
        %v528 = vlaneseq
        %v529 = vshrl.u32 %v528, 7
        %v530 = vsub.s32 0, %v529
        %v531 = vrot.slane %v485, %v530
        %v532 = vmul.f32 %v531, %v498
        %v533 = vmul.f32 %v531, %v499
        %v534 = vmul.f32 %v532, %v526
        %v535 = vmul.f32 %v533, %v527
        %v536 = vlaneseq
        %v537 = vshrl.u32 %v536, 7
        %v538 = vsub.s32 1, %v537
        %v539 = vrot.slane %v485, %v538
        %v540 = vadd.f32 %v534, %v539
        %v541 = vadd.f32 %v535, %v539
        %v542 = vld [vmem:[%s447] sm:$0xff]
        %v543 = vld [vmem:[%s447 + $0x8] sm:$0xff]
        %v544 = vld [vmem:[%s447 + $0x10] sm:$0xff]
        %v545 = vld [vmem:[%s447 + $0x18] sm:$0xff]
        %v547 = vsel %vm488, %v540, 0
        %v550 = vsel %vm488, %v541, 0
        %552 = vmatprep.subr.mxu0 0.0
        %553 = vmatpush1.msra.mxu0 0.0
        %554 = vmatprep.subr.mxu0 0.0
        %555 = vmatpush1.msra.mxu0 0.0
        %556 = vmatprep.subr.mxu0 0.0
        %557 = vmatpush1.msra.mxu0 0.0
        %558 = vmatprep.subr.mxu0 0.0
        %559 = vmatpush1.msra.mxu0 0.0
        %560 = vmatprep.subr.mxu0 0.0
        %561 = vmatpush1.msra.mxu0 0.0
        %562 = vmatprep.subr.mxu0 0.0
        %563 = vmatpush1.msra.mxu0 0.0
        %564 = vmatprep.subr.mxu0 0.0
        %565 = vmatpush1.msra.mxu0 0.0
        %566 = vmatprep.subr.mxu0 0.0
        %567 = vmatpush1.msra.mxu0 0.0
        %568 = vmatprep.subr.mxu0 0.0
        %569 = vmatpush1.msra.mxu0 0.0
        %570 = vmatprep.subr.mxu0 0.0
        %571 = vmatpush1.msra.mxu0 0.0
        %572 = vmatprep.subr.mxu0 0.0
        %573 = vmatpush1.msra.mxu0 0.0
        %574 = vmatprep.subr.mxu0 0.0
        %575 = vmatpush1.msra.mxu0 0.0
        %576 = vmatprep.subr.mxu0 0.0
        %577 = vmatpush1.msra.mxu0 %v545
        %578 = vmatprep.subr.mxu0 0.0
        %579 = vmatpush1.msra.mxu0 %v544
        %580 = vmatprep.subr.mxu0 0.0
        %581 = vmatpush1.msra.mxu0 %v543
        %582 = vmatprep.subr.mxu0 0.0
        %583 = vmatpush1.msra.mxu0 %v542
        %584 = vmatprep.subr.mxu0 0.0
        %585 = vmatpush2.msra.mxu0 0.0
        %586 = vmatprep.subr.mxu0 0.0
        %587 = vmatpush2.msra.mxu0 0.0
        %588 = vmatprep.subr.mxu0 0.0
        %589 = vmatpush2.msra.mxu0 0.0
        %590 = vmatprep.subr.mxu0 0.0
        %591 = vmatpush2.msra.mxu0 0.0
        %592 = vmatprep.subr.mxu0 0.0
        %593 = vmatpush2.msra.mxu0 0.0
        %594 = vmatprep.subr.mxu0 0.0
        %595 = vmatpush2.msra.mxu0 0.0
        %596 = vmatprep.subr.mxu0 0.0
        %597 = vmatpush2.msra.mxu0 0.0
        %598 = vmatprep.subr.mxu0 0.0
        %599 = vmatpush2.msra.mxu0 0.0
        %600 = vmatprep.subr.mxu0 0.0
        %601 = vmatpush2.msra.mxu0 0.0
        %602 = vmatprep.subr.mxu0 0.0
        %603 = vmatpush2.msra.mxu0 0.0
        %604 = vmatprep.subr.mxu0 0.0
        %605 = vmatpush2.msra.mxu0 0.0
        %606 = vmatprep.subr.mxu0 0.0
        %607 = vmatpush2.msra.mxu0 0.0
        %608 = vmatprep.subr.mxu0 0.0
        %609 = vmatpush2.msra.mxu0 0.0
        %610 = vmatprep.subr.mxu0 0.0
        %611 = vmatpush2.msra.mxu0 0.0
        %612 = vmatprep.subr.mxu0 0.0
        %613 = vmatpush2.msra.mxu0 0.0
        %614 = vmatprep.subr.mxu0 0.0
        %615 = vmatpush2.msra.mxu0 0.0
        %616 = vmatprep.mubr.f32.mxu0 0.0
        %617 = vmatmul.mubr.f32.gmra.mxu0 %v547
        %v618 = vpop.f32.mrf.mxu0
        %v619 = vadd.f32 0.0, %v618
        %v620 = vpop.f32.mrf.mxu0
        %621 = vmatprep.mubr.f32.mxu0 0.0
        %622 = vmatmul.mubr.f32.gmra.mxu0 %v550
        %v623 = vpop.f32.mrf.mxu0
        %v624 = vadd.f32 0.0, %v623
        %v625 = vpop.f32.mrf.mxu0
        %626 = vdwg.mxu0
        %v627 = vlaneseq
        %v628 = vshrl.u32 %v627, 7
        %v629 = vsub.s32 4, %v628
        %v630 = vrot.slane %v485, %v629
        %v631 = vadd.f32 %v619, %v630
        %v632 = vadd.f32 %v624, %v630
        %v633 = vlaneseq
        %v634 = vshrl.u32 %v633, 7
        %v635 = vsub.s32 5, %v634
        %v636 = vrot.slane %v485, %v635
        %638 = vrot.lane.b32.xlu0 %v636, 32
        %v639 = vpop.permute.xlu0 %638
        %v641 = vadd.f32 %v619, %v639
        %v642 = vadd.f32 %v624, %v639
        %v643 = vlaneseq
        %v644 = vshrl.u32 %v643, 7
        %v645 = vsub.s32 6, %v644
        %v646 = vrot.slane %v485, %v645
        %648 = vrot.lane.b32.xlu0 %v646, 64
        %v649 = vpop.permute.xlu0 %648
        %v651 = vadd.f32 %v619, %v649
        %v652 = vadd.f32 %v624, %v649
        %v655 = vlaneseq
        %v656 = vshrl.u32 %v655, 7
        %v657 = vsub.s32 0, %v656
        %v658 = vrot.slane %v483, %v657
        %v659 = vlaneseq
        %v660 = vshrl.u32 %v659, 7
        %v661 = vsub.s32 0, %v660
        %v662 = vrot.slane %v484, %v661
        %666 = vrot.lane.b32.xlu0 %v641, 96
        %v667 = vpop.permute.xlu0 %666
        %vm668 = vcmask 64512
        %v670 = vsel %vm668, %v631, 0
        %v672 = vsel %vm668, %v667, 0
        %674 = vmatprep.subr.mxu0 0.0
        %675 = vmatpush1.xpose.msra.mxu0 0.0
        %676 = vmatprep.subr.mxu0 0.0
        %677 = vmatpush1.xpose.msra.mxu0 0.0
        %678 = vmatprep.subr.mxu0 0.0
        %679 = vmatpush1.xpose.msra.mxu0 0.0
        %680 = vmatprep.subr.mxu0 0.0
        %681 = vmatpush1.xpose.msra.mxu0 0.0
        %682 = vmatprep.subr.mxu0 0.0
        %683 = vmatpush1.xpose.msra.mxu0 0.0
        %684 = vmatprep.subr.mxu0 0.0
        %685 = vmatpush1.xpose.msra.mxu0 0.0
        %686 = vmatprep.subr.mxu0 0.0
        %687 = vmatpush1.xpose.msra.mxu0 0.0
        %688 = vmatprep.subr.mxu0 0.0
        %689 = vmatpush1.xpose.msra.mxu0 0.0
        %690 = vmatprep.subr.mxu0 0.0
        %691 = vmatpush1.xpose.msra.mxu0 0.0
        %692 = vmatprep.subr.mxu0 0.0
        %693 = vmatpush1.xpose.msra.mxu0 0.0
        %694 = vmatprep.subr.mxu0 0.0
        %695 = vmatpush1.xpose.msra.mxu0 0.0
        %696 = vmatprep.subr.mxu0 0.0
        %697 = vmatpush1.xpose.msra.mxu0 0.0
        %698 = vmatprep.subr.mxu0 0.0
        %699 = vmatpush1.xpose.msra.mxu0 0.0
        %700 = vmatprep.subr.mxu0 0.0
        %701 = vmatpush1.xpose.msra.mxu0 0.0
        %702 = vmatprep.subr.mxu0 0.0
        %703 = vmatpush1.xpose.msra.mxu0 0.0
        %704 = vmatprep.subr.mxu0 0.0
        %705 = vmatpush1.xpose.msra.mxu0 %v672
        %706 = vmatprep.subr.mxu0 0.0
        %707 = vmatpush2.xpose.msra.mxu0 0.0
        %708 = vmatprep.subr.mxu0 0.0
        %709 = vmatpush2.xpose.msra.mxu0 0.0
        %710 = vmatprep.subr.mxu0 0.0
        %711 = vmatpush2.xpose.msra.mxu0 0.0
        %712 = vmatprep.subr.mxu0 0.0
        %713 = vmatpush2.xpose.msra.mxu0 0.0
        %714 = vmatprep.subr.mxu0 0.0
        %715 = vmatpush2.xpose.msra.mxu0 0.0
        %716 = vmatprep.subr.mxu0 0.0
        %717 = vmatpush2.xpose.msra.mxu0 0.0
        %718 = vmatprep.subr.mxu0 0.0
        %719 = vmatpush2.xpose.msra.mxu0 0.0
        %720 = vmatprep.subr.mxu0 0.0
        %721 = vmatpush2.xpose.msra.mxu0 0.0
        %722 = vmatprep.subr.mxu0 0.0
        %723 = vmatpush2.xpose.msra.mxu0 0.0
        %724 = vmatprep.subr.mxu0 0.0
        %725 = vmatpush2.xpose.msra.mxu0 0.0
        %726 = vmatprep.subr.mxu0 0.0
        %727 = vmatpush2.xpose.msra.mxu0 0.0
        %728 = vmatprep.subr.mxu0 0.0
        %729 = vmatpush2.xpose.msra.mxu0 0.0
        %730 = vmatprep.subr.mxu0 0.0
        %731 = vmatpush2.xpose.msra.mxu0 0.0
        %732 = vmatprep.subr.mxu0 0.0
        %733 = vmatpush2.xpose.msra.mxu0 0.0
        %734 = vmatprep.subr.mxu0 0.0
        %735 = vmatpush2.xpose.msra.mxu0 0.0
        %736 = vmatprep.subr.mxu0 0.0
        %737 = vmatpush2.xpose.msra.mxu0 0.0
        %738 = vmatprep.mubr.f32.mxu0 0.0
        %739 = vmatmul.mubr.f32.gmra.mxu0 %v670
        %v740 = vpop.f32.mrf.mxu0
        %v741 = vadd.f32 %v658, %v740
        %v742 = vpop.f32.mrf.mxu0
        %743 = vdwg.mxu0
        %745 = vrot.lane.b32.xlu0 %v642, 96
        %v746 = vpop.permute.xlu0 %745
        %v748 = vsel %vm668, %v632, 0
        %v750 = vsel %vm668, %v746, 0
        %752 = vmatprep.subr.mxu0 0.0
        %753 = vmatpush1.xpose.msra.mxu0 0.0
        %754 = vmatprep.subr.mxu0 0.0
        %755 = vmatpush1.xpose.msra.mxu0 0.0
        %756 = vmatprep.subr.mxu0 0.0
        %757 = vmatpush1.xpose.msra.mxu0 0.0
        %758 = vmatprep.subr.mxu0 0.0
        %759 = vmatpush1.xpose.msra.mxu0 0.0
        %760 = vmatprep.subr.mxu0 0.0
        %761 = vmatpush1.xpose.msra.mxu0 0.0
        %762 = vmatprep.subr.mxu0 0.0
        %763 = vmatpush1.xpose.msra.mxu0 0.0
        %764 = vmatprep.subr.mxu0 0.0
        %765 = vmatpush1.xpose.msra.mxu0 0.0
        %766 = vmatprep.subr.mxu0 0.0
        %767 = vmatpush1.xpose.msra.mxu0 0.0
        %768 = vmatprep.subr.mxu0 0.0
        %769 = vmatpush1.xpose.msra.mxu0 0.0
        %770 = vmatprep.subr.mxu0 0.0
        %771 = vmatpush1.xpose.msra.mxu0 0.0
        %772 = vmatprep.subr.mxu0 0.0
        %773 = vmatpush1.xpose.msra.mxu0 0.0
        %774 = vmatprep.subr.mxu0 0.0
        %775 = vmatpush1.xpose.msra.mxu0 0.0
        %776 = vmatprep.subr.mxu0 0.0
        %777 = vmatpush1.xpose.msra.mxu0 0.0
        %778 = vmatprep.subr.mxu0 0.0
        %779 = vmatpush1.xpose.msra.mxu0 0.0
        %780 = vmatprep.subr.mxu0 0.0
        %781 = vmatpush1.xpose.msra.mxu0 0.0
        %782 = vmatprep.subr.mxu0 0.0
        %783 = vmatpush1.xpose.msra.mxu0 %v750
        %784 = vmatprep.subr.mxu0 0.0
        %785 = vmatpush2.xpose.msra.mxu0 0.0
        %786 = vmatprep.subr.mxu0 0.0
        %787 = vmatpush2.xpose.msra.mxu0 0.0
        %788 = vmatprep.subr.mxu0 0.0
        %789 = vmatpush2.xpose.msra.mxu0 0.0
        %790 = vmatprep.subr.mxu0 0.0
        %791 = vmatpush2.xpose.msra.mxu0 0.0
        %792 = vmatprep.subr.mxu0 0.0
        %793 = vmatpush2.xpose.msra.mxu0 0.0
        %794 = vmatprep.subr.mxu0 0.0
        %795 = vmatpush2.xpose.msra.mxu0 0.0
        %796 = vmatprep.subr.mxu0 0.0
        %797 = vmatpush2.xpose.msra.mxu0 0.0
        %798 = vmatprep.subr.mxu0 0.0
        %799 = vmatpush2.xpose.msra.mxu0 0.0
        %800 = vmatprep.subr.mxu0 0.0
        %801 = vmatpush2.xpose.msra.mxu0 0.0
        %802 = vmatprep.subr.mxu0 0.0
        %803 = vmatpush2.xpose.msra.mxu0 0.0
        %804 = vmatprep.subr.mxu0 0.0
        %805 = vmatpush2.xpose.msra.mxu0 0.0
        %806 = vmatprep.subr.mxu0 0.0
        %807 = vmatpush2.xpose.msra.mxu0 0.0
        %808 = vmatprep.subr.mxu0 0.0
        %809 = vmatpush2.xpose.msra.mxu0 0.0
        %810 = vmatprep.subr.mxu0 0.0
        %811 = vmatpush2.xpose.msra.mxu0 0.0
        %812 = vmatprep.subr.mxu0 0.0
        %813 = vmatpush2.xpose.msra.mxu0 0.0
        %814 = vmatprep.subr.mxu0 0.0
        %815 = vmatpush2.xpose.msra.mxu0 0.0
        %816 = vmatprep.mubr.f32.mxu0 0.0
        %817 = vmatmul.mubr.f32.gmra.mxu0 %v748
        %v818 = vpop.f32.mrf.mxu0
        %v819 = vadd.f32 %v662, %v818
        %v820 = vpop.f32.mrf.mxu0
        %821 = vdwg.mxu0
        %v822 = vsel %vm668, %v741, -inf
        %823 = vmax.xlane.f32.xlu0 %v822
        %v824 = vpop.xlane.xlu0 %823
        %v825 = vsel %vm668, %v819, -inf
        %826 = vmax.xlane.f32.xlu0 %v825
        %v827 = vpop.xlane.xlu0 %826
        %v828 = vsub.f32 %v741, %v824
        %v829 = vsub.f32 %v819, %v827
        %v830 = vmul.f32 %v828, 1.442695
        %v831 = vpow.pop %v830
        %v832 = vmul.f32 %v829, 1.442695
        %v833 = vpow.pop %v832
        %v834 = vsel %vm668, %v831, 0.0
        %835 = vadd.xlane.f32.xlu0 %v834
        %v836 = vpop.xlane.xlu0 %835
        %v837 = vsel %vm668, %v833, 0.0
        %838 = vadd.xlane.f32.xlu0 %v837
        %v839 = vpop.xlane.xlu0 %838
        %v840 = vrcp.pop %v836
        %v841 = vrcp.pop %v839
        %v842 = vmul.f32 %v831, %v840
        %v843 = vmul.f32 %v833, %v841
        %845 = vrot.lane.b32.xlu0 %v651, 64
        %v846 = vpop.permute.xlu0 %845
        %v849 = vsel %vm668, %v842, 0
        %851 = vmatprep.subr.mxu0 0.0
        %852 = vmatpush1.msra.mxu0 0.0
        %853 = vmatprep.subr.mxu0 0.0
        %854 = vmatpush1.msra.mxu0 0.0
        %855 = vmatprep.subr.mxu0 0.0
        %856 = vmatpush1.msra.mxu0 0.0
        %857 = vmatprep.subr.mxu0 0.0
        %858 = vmatpush1.msra.mxu0 0.0
        %859 = vmatprep.subr.mxu0 0.0
        %860 = vmatpush1.msra.mxu0 0.0
        %861 = vmatprep.subr.mxu0 0.0
        %862 = vmatpush1.msra.mxu0 0.0
        %863 = vmatprep.subr.mxu0 0.0
        %864 = vmatpush1.msra.mxu0 0.0
        %865 = vmatprep.subr.mxu0 0.0
        %866 = vmatpush1.msra.mxu0 0.0
        %867 = vmatprep.subr.mxu0 0.0
        %868 = vmatpush1.msra.mxu0 0.0
        %869 = vmatprep.subr.mxu0 0.0
        %870 = vmatpush1.msra.mxu0 0.0
        %871 = vmatprep.subr.mxu0 0.0
        %872 = vmatpush1.msra.mxu0 0.0
        %873 = vmatprep.subr.mxu0 0.0
        %874 = vmatpush1.msra.mxu0 0.0
        %875 = vmatprep.subr.mxu0 0.0
        %876 = vmatpush1.msra.mxu0 0.0
        %877 = vmatprep.subr.mxu0 0.0
        %878 = vmatpush1.msra.mxu0 0.0
        %879 = vmatprep.subr.mxu0 0.0
        %880 = vmatpush1.msra.mxu0 0.0
        %881 = vmatprep.subr.mxu0 0.0
        %882 = vmatpush1.msra.mxu0 %v846
        %883 = vmatprep.subr.mxu0 0.0
        %884 = vmatpush2.msra.mxu0 0.0
        %885 = vmatprep.subr.mxu0 0.0
        %886 = vmatpush2.msra.mxu0 0.0
        %887 = vmatprep.subr.mxu0 0.0
        %888 = vmatpush2.msra.mxu0 0.0
        %889 = vmatprep.subr.mxu0 0.0
        %890 = vmatpush2.msra.mxu0 0.0
        %891 = vmatprep.subr.mxu0 0.0
        %892 = vmatpush2.msra.mxu0 0.0
        %893 = vmatprep.subr.mxu0 0.0
        %894 = vmatpush2.msra.mxu0 0.0
        %895 = vmatprep.subr.mxu0 0.0
        %896 = vmatpush2.msra.mxu0 0.0
        %897 = vmatprep.subr.mxu0 0.0
        %898 = vmatpush2.msra.mxu0 0.0
        %899 = vmatprep.subr.mxu0 0.0
        %900 = vmatpush2.msra.mxu0 0.0
        %901 = vmatprep.subr.mxu0 0.0
        %902 = vmatpush2.msra.mxu0 0.0
        %903 = vmatprep.subr.mxu0 0.0
        %904 = vmatpush2.msra.mxu0 0.0
        %905 = vmatprep.subr.mxu0 0.0
        %906 = vmatpush2.msra.mxu0 0.0
        %907 = vmatprep.subr.mxu0 0.0
        %908 = vmatpush2.msra.mxu0 0.0
        %909 = vmatprep.subr.mxu0 0.0
        %910 = vmatpush2.msra.mxu0 0.0
        %911 = vmatprep.subr.mxu0 0.0
        %912 = vmatpush2.msra.mxu0 0.0
        %913 = vmatprep.subr.mxu0 0.0
        %914 = vmatpush2.msra.mxu0 0.0
        %915 = vmatprep.mubr.f32.mxu0 0.0
        %916 = vmatmul.mubr.f32.gmra.mxu0 %v849
        %v917 = vpop.f32.mrf.mxu0
        %v918 = vadd.f32 0.0, %v917
        %v919 = vpop.f32.mrf.mxu0
        %920 = vdwg.mxu0
        %922 = vrot.lane.b32.xlu0 %v652, 64
        %v923 = vpop.permute.xlu0 %922
        %v926 = vsel %vm668, %v843, 0
        %928 = vmatprep.subr.mxu0 0.0
        %929 = vmatpush1.msra.mxu0 0.0
        %930 = vmatprep.subr.mxu0 0.0
        %931 = vmatpush1.msra.mxu0 0.0
        %932 = vmatprep.subr.mxu0 0.0
        %933 = vmatpush1.msra.mxu0 0.0
        %934 = vmatprep.subr.mxu0 0.0
        %935 = vmatpush1.msra.mxu0 0.0
        %936 = vmatprep.subr.mxu0 0.0
        %937 = vmatpush1.msra.mxu0 0.0
        %938 = vmatprep.subr.mxu0 0.0
        %939 = vmatpush1.msra.mxu0 0.0
        %940 = vmatprep.subr.mxu0 0.0
        %941 = vmatpush1.msra.mxu0 0.0
        %942 = vmatprep.subr.mxu0 0.0
        %943 = vmatpush1.msra.mxu0 0.0
        %944 = vmatprep.subr.mxu0 0.0
        %945 = vmatpush1.msra.mxu0 0.0
        %946 = vmatprep.subr.mxu0 0.0
        %947 = vmatpush1.msra.mxu0 0.0
        %948 = vmatprep.subr.mxu0 0.0
        %949 = vmatpush1.msra.mxu0 0.0
        %950 = vmatprep.subr.mxu0 0.0
        %951 = vmatpush1.msra.mxu0 0.0
        %952 = vmatprep.subr.mxu0 0.0
        %953 = vmatpush1.msra.mxu0 0.0
        %954 = vmatprep.subr.mxu0 0.0
        %955 = vmatpush1.msra.mxu0 0.0
        %956 = vmatprep.subr.mxu0 0.0
        %957 = vmatpush1.msra.mxu0 0.0
        %958 = vmatprep.subr.mxu0 0.0
        %959 = vmatpush1.msra.mxu0 %v923
        %960 = vmatprep.subr.mxu0 0.0
        %961 = vmatpush2.msra.mxu0 0.0
        %962 = vmatprep.subr.mxu0 0.0
        %963 = vmatpush2.msra.mxu0 0.0
        %964 = vmatprep.subr.mxu0 0.0
        %965 = vmatpush2.msra.mxu0 0.0
        %966 = vmatprep.subr.mxu0 0.0
        %967 = vmatpush2.msra.mxu0 0.0
        %968 = vmatprep.subr.mxu0 0.0
        %969 = vmatpush2.msra.mxu0 0.0
        %970 = vmatprep.subr.mxu0 0.0
        %971 = vmatpush2.msra.mxu0 0.0
        %972 = vmatprep.subr.mxu0 0.0
        %973 = vmatpush2.msra.mxu0 0.0
        %974 = vmatprep.subr.mxu0 0.0
        %975 = vmatpush2.msra.mxu0 0.0
        %976 = vmatprep.subr.mxu0 0.0
        %977 = vmatpush2.msra.mxu0 0.0
        %978 = vmatprep.subr.mxu0 0.0
        %979 = vmatpush2.msra.mxu0 0.0
        %980 = vmatprep.subr.mxu0 0.0
        %981 = vmatpush2.msra.mxu0 0.0
        %982 = vmatprep.subr.mxu0 0.0
        %983 = vmatpush2.msra.mxu0 0.0
        %984 = vmatprep.subr.mxu0 0.0
        %985 = vmatpush2.msra.mxu0 0.0
        %986 = vmatprep.subr.mxu0 0.0
        %987 = vmatpush2.msra.mxu0 0.0
        %988 = vmatprep.subr.mxu0 0.0
        %989 = vmatpush2.msra.mxu0 0.0
        %990 = vmatprep.subr.mxu0 0.0
        %991 = vmatpush2.msra.mxu0 0.0
        %992 = vmatprep.mubr.f32.mxu0 0.0
        %993 = vmatmul.mubr.f32.gmra.mxu0 %v926
        %v994 = vpop.f32.mrf.mxu0
        %v995 = vadd.f32 0.0, %v994
        %v996 = vpop.f32.mrf.mxu0
        %997 = vdwg.mxu0
        %998 = vrot.lane.b32.xlu0 %v631, 120
        %v999 = vpop.permute.xlu0 %998
        %1000 = vrot.lane.b32.xlu0 %v641, 88
        %v1001 = vpop.permute.xlu0 %1000
        %v1002 = vsel %vm668, %v999, 0
        %v1004 = vsel %vm668, %v1001, 0
        %1006 = vmatprep.subr.mxu0 0.0
        %1007 = vmatpush1.xpose.msra.mxu0 0.0
        %1008 = vmatprep.subr.mxu0 0.0
        %1009 = vmatpush1.xpose.msra.mxu0 0.0
        %1010 = vmatprep.subr.mxu0 0.0
        %1011 = vmatpush1.xpose.msra.mxu0 0.0
        %1012 = vmatprep.subr.mxu0 0.0
        %1013 = vmatpush1.xpose.msra.mxu0 0.0
        %1014 = vmatprep.subr.mxu0 0.0
        %1015 = vmatpush1.xpose.msra.mxu0 0.0
        %1016 = vmatprep.subr.mxu0 0.0
        %1017 = vmatpush1.xpose.msra.mxu0 0.0
        %1018 = vmatprep.subr.mxu0 0.0
        %1019 = vmatpush1.xpose.msra.mxu0 0.0
        %1020 = vmatprep.subr.mxu0 0.0
        %1021 = vmatpush1.xpose.msra.mxu0 0.0
        %1022 = vmatprep.subr.mxu0 0.0
        %1023 = vmatpush1.xpose.msra.mxu0 0.0
        %1024 = vmatprep.subr.mxu0 0.0
        %1025 = vmatpush1.xpose.msra.mxu0 0.0
        %1026 = vmatprep.subr.mxu0 0.0
        %1027 = vmatpush1.xpose.msra.mxu0 0.0
        %1028 = vmatprep.subr.mxu0 0.0
        %1029 = vmatpush1.xpose.msra.mxu0 0.0
        %1030 = vmatprep.subr.mxu0 0.0
        %1031 = vmatpush1.xpose.msra.mxu0 0.0
        %1032 = vmatprep.subr.mxu0 0.0
        %1033 = vmatpush1.xpose.msra.mxu0 0.0
        %1034 = vmatprep.subr.mxu0 0.0
        %1035 = vmatpush1.xpose.msra.mxu0 0.0
        %1036 = vmatprep.subr.mxu0 0.0
        %1037 = vmatpush1.xpose.msra.mxu0 %v1004
        %1038 = vmatprep.subr.mxu0 0.0
        %1039 = vmatpush2.xpose.msra.mxu0 0.0
        %1040 = vmatprep.subr.mxu0 0.0
        %1041 = vmatpush2.xpose.msra.mxu0 0.0
        %1042 = vmatprep.subr.mxu0 0.0
        %1043 = vmatpush2.xpose.msra.mxu0 0.0
        %1044 = vmatprep.subr.mxu0 0.0
        %1045 = vmatpush2.xpose.msra.mxu0 0.0
        %1046 = vmatprep.subr.mxu0 0.0
        %1047 = vmatpush2.xpose.msra.mxu0 0.0
        %1048 = vmatprep.subr.mxu0 0.0
        %1049 = vmatpush2.xpose.msra.mxu0 0.0
        %1050 = vmatprep.subr.mxu0 0.0
        %1051 = vmatpush2.xpose.msra.mxu0 0.0
        %1052 = vmatprep.subr.mxu0 0.0
        %1053 = vmatpush2.xpose.msra.mxu0 0.0
        %1054 = vmatprep.subr.mxu0 0.0
        %1055 = vmatpush2.xpose.msra.mxu0 0.0
        %1056 = vmatprep.subr.mxu0 0.0
        %1057 = vmatpush2.xpose.msra.mxu0 0.0
        %1058 = vmatprep.subr.mxu0 0.0
        %1059 = vmatpush2.xpose.msra.mxu0 0.0
        %1060 = vmatprep.subr.mxu0 0.0
        %1061 = vmatpush2.xpose.msra.mxu0 0.0
        %1062 = vmatprep.subr.mxu0 0.0
        %1063 = vmatpush2.xpose.msra.mxu0 0.0
        %1064 = vmatprep.subr.mxu0 0.0
        %1065 = vmatpush2.xpose.msra.mxu0 0.0
        %1066 = vmatprep.subr.mxu0 0.0
        %1067 = vmatpush2.xpose.msra.mxu0 0.0
        %1068 = vmatprep.subr.mxu0 0.0
        %1069 = vmatpush2.xpose.msra.mxu0 0.0
        %1070 = vmatprep.mubr.f32.mxu0 0.0
        %1071 = vmatmul.mubr.f32.gmra.mxu0 %v1002
        %v1072 = vpop.f32.mrf.mxu0
        %v1073 = vadd.f32 %v658, %v1072
        %v1074 = vpop.f32.mrf.mxu0
        %1075 = vdwg.mxu0
        %1076 = vrot.lane.b32.xlu0 %v632, 120
        %v1077 = vpop.permute.xlu0 %1076
        %1078 = vrot.lane.b32.xlu0 %v642, 88
        %v1079 = vpop.permute.xlu0 %1078
        %v1080 = vsel %vm668, %v1077, 0
        %v1082 = vsel %vm668, %v1079, 0
        %1084 = vmatprep.subr.mxu0 0.0
        %1085 = vmatpush1.xpose.msra.mxu0 0.0
        %1086 = vmatprep.subr.mxu0 0.0
        %1087 = vmatpush1.xpose.msra.mxu0 0.0
        %1088 = vmatprep.subr.mxu0 0.0
        %1089 = vmatpush1.xpose.msra.mxu0 0.0
        %1090 = vmatprep.subr.mxu0 0.0
        %1091 = vmatpush1.xpose.msra.mxu0 0.0
        %1092 = vmatprep.subr.mxu0 0.0
        %1093 = vmatpush1.xpose.msra.mxu0 0.0
        %1094 = vmatprep.subr.mxu0 0.0
        %1095 = vmatpush1.xpose.msra.mxu0 0.0
        %1096 = vmatprep.subr.mxu0 0.0
        %1097 = vmatpush1.xpose.msra.mxu0 0.0
        %1098 = vmatprep.subr.mxu0 0.0
        %1099 = vmatpush1.xpose.msra.mxu0 0.0
        %1100 = vmatprep.subr.mxu0 0.0
        %1101 = vmatpush1.xpose.msra.mxu0 0.0
        %1102 = vmatprep.subr.mxu0 0.0
        %1103 = vmatpush1.xpose.msra.mxu0 0.0
        %1104 = vmatprep.subr.mxu0 0.0
        %1105 = vmatpush1.xpose.msra.mxu0 0.0
        %1106 = vmatprep.subr.mxu0 0.0
        %1107 = vmatpush1.xpose.msra.mxu0 0.0
        %1108 = vmatprep.subr.mxu0 0.0
        %1109 = vmatpush1.xpose.msra.mxu0 0.0
        %1110 = vmatprep.subr.mxu0 0.0
        %1111 = vmatpush1.xpose.msra.mxu0 0.0
        %1112 = vmatprep.subr.mxu0 0.0
        %1113 = vmatpush1.xpose.msra.mxu0 0.0
        %1114 = vmatprep.subr.mxu0 0.0
        %1115 = vmatpush1.xpose.msra.mxu0 %v1082
        %1116 = vmatprep.subr.mxu0 0.0
        %1117 = vmatpush2.xpose.msra.mxu0 0.0
        %1118 = vmatprep.subr.mxu0 0.0
        %1119 = vmatpush2.xpose.msra.mxu0 0.0
        %1120 = vmatprep.subr.mxu0 0.0
        %1121 = vmatpush2.xpose.msra.mxu0 0.0
        %1122 = vmatprep.subr.mxu0 0.0
        %1123 = vmatpush2.xpose.msra.mxu0 0.0
        %1124 = vmatprep.subr.mxu0 0.0
        %1125 = vmatpush2.xpose.msra.mxu0 0.0
        %1126 = vmatprep.subr.mxu0 0.0
        %1127 = vmatpush2.xpose.msra.mxu0 0.0
        %1128 = vmatprep.subr.mxu0 0.0
        %1129 = vmatpush2.xpose.msra.mxu0 0.0
        %1130 = vmatprep.subr.mxu0 0.0
        %1131 = vmatpush2.xpose.msra.mxu0 0.0
        %1132 = vmatprep.subr.mxu0 0.0
        %1133 = vmatpush2.xpose.msra.mxu0 0.0
        %1134 = vmatprep.subr.mxu0 0.0
        %1135 = vmatpush2.xpose.msra.mxu0 0.0
        %1136 = vmatprep.subr.mxu0 0.0
        %1137 = vmatpush2.xpose.msra.mxu0 0.0
        %1138 = vmatprep.subr.mxu0 0.0
        %1139 = vmatpush2.xpose.msra.mxu0 0.0
        %1140 = vmatprep.subr.mxu0 0.0
        %1141 = vmatpush2.xpose.msra.mxu0 0.0
        %1142 = vmatprep.subr.mxu0 0.0
        %1143 = vmatpush2.xpose.msra.mxu0 0.0
        %1144 = vmatprep.subr.mxu0 0.0
        %1145 = vmatpush2.xpose.msra.mxu0 0.0
        %1146 = vmatprep.subr.mxu0 0.0
        %1147 = vmatpush2.xpose.msra.mxu0 0.0
        %1148 = vmatprep.mubr.f32.mxu0 0.0
        %1149 = vmatmul.mubr.f32.gmra.mxu0 %v1080
        %v1150 = vpop.f32.mrf.mxu0
        %v1151 = vadd.f32 %v662, %v1150
        %v1152 = vpop.f32.mrf.mxu0
        %1153 = vdwg.mxu0
        %v1154 = vsel %vm668, %v1073, -inf
        %1155 = vmax.xlane.f32.xlu0 %v1154
        %v1156 = vpop.xlane.xlu0 %1155
        %v1157 = vsel %vm668, %v1151, -inf
        %1158 = vmax.xlane.f32.xlu0 %v1157
        %v1159 = vpop.xlane.xlu0 %1158
        %v1160 = vsub.f32 %v1073, %v1156
        %v1161 = vsub.f32 %v1151, %v1159
        %v1162 = vmul.f32 %v1160, 1.442695
        %v1163 = vpow.pop %v1162
        %v1164 = vmul.f32 %v1161, 1.442695
        %v1165 = vpow.pop %v1164
        %v1166 = vsel %vm668, %v1163, 0.0
        %1167 = vadd.xlane.f32.xlu0 %v1166
        %v1168 = vpop.xlane.xlu0 %1167
        %v1169 = vsel %vm668, %v1165, 0.0
        %1170 = vadd.xlane.f32.xlu0 %v1169
        %v1171 = vpop.xlane.xlu0 %1170
        %v1172 = vrcp.pop %v1168
        %v1173 = vrcp.pop %v1171
        %v1174 = vmul.f32 %v1163, %v1172
        %v1175 = vmul.f32 %v1165, %v1173
        %1176 = vrot.lane.b32.xlu0 %v651, 56
        %v1177 = vpop.permute.xlu0 %1176
        %v1180 = vsel %vm668, %v1174, 0
        %1182 = vmatprep.subr.mxu0 0.0
        %1183 = vmatpush1.msra.mxu0 0.0
        %1184 = vmatprep.subr.mxu0 0.0
        %1185 = vmatpush1.msra.mxu0 0.0
        %1186 = vmatprep.subr.mxu0 0.0
        %1187 = vmatpush1.msra.mxu0 0.0
        %1188 = vmatprep.subr.mxu0 0.0
        %1189 = vmatpush1.msra.mxu0 0.0
        %1190 = vmatprep.subr.mxu0 0.0
        %1191 = vmatpush1.msra.mxu0 0.0
        %1192 = vmatprep.subr.mxu0 0.0
        %1193 = vmatpush1.msra.mxu0 0.0
        %1194 = vmatprep.subr.mxu0 0.0
        %1195 = vmatpush1.msra.mxu0 0.0
        %1196 = vmatprep.subr.mxu0 0.0
        %1197 = vmatpush1.msra.mxu0 0.0
        %1198 = vmatprep.subr.mxu0 0.0
        %1199 = vmatpush1.msra.mxu0 0.0
        %1200 = vmatprep.subr.mxu0 0.0
        %1201 = vmatpush1.msra.mxu0 0.0
        %1202 = vmatprep.subr.mxu0 0.0
        %1203 = vmatpush1.msra.mxu0 0.0
        %1204 = vmatprep.subr.mxu0 0.0
        %1205 = vmatpush1.msra.mxu0 0.0
        %1206 = vmatprep.subr.mxu0 0.0
        %1207 = vmatpush1.msra.mxu0 0.0
        %1208 = vmatprep.subr.mxu0 0.0
        %1209 = vmatpush1.msra.mxu0 0.0
        %1210 = vmatprep.subr.mxu0 0.0
        %1211 = vmatpush1.msra.mxu0 0.0
        %1212 = vmatprep.subr.mxu0 0.0
        %1213 = vmatpush1.msra.mxu0 %v1177
        %1214 = vmatprep.subr.mxu0 0.0
        %1215 = vmatpush2.msra.mxu0 0.0
        %1216 = vmatprep.subr.mxu0 0.0
        %1217 = vmatpush2.msra.mxu0 0.0
        %1218 = vmatprep.subr.mxu0 0.0
        %1219 = vmatpush2.msra.mxu0 0.0
        %1220 = vmatprep.subr.mxu0 0.0
        %1221 = vmatpush2.msra.mxu0 0.0
        %1222 = vmatprep.subr.mxu0 0.0
        %1223 = vmatpush2.msra.mxu0 0.0
        %1224 = vmatprep.subr.mxu0 0.0
        %1225 = vmatpush2.msra.mxu0 0.0
        %1226 = vmatprep.subr.mxu0 0.0
        %1227 = vmatpush2.msra.mxu0 0.0
        %1228 = vmatprep.subr.mxu0 0.0
        %1229 = vmatpush2.msra.mxu0 0.0
        %1230 = vmatprep.subr.mxu0 0.0
        %1231 = vmatpush2.msra.mxu0 0.0
        %1232 = vmatprep.subr.mxu0 0.0
        %1233 = vmatpush2.msra.mxu0 0.0
        %1234 = vmatprep.subr.mxu0 0.0
        %1235 = vmatpush2.msra.mxu0 0.0
        %1236 = vmatprep.subr.mxu0 0.0
        %1237 = vmatpush2.msra.mxu0 0.0
        %1238 = vmatprep.subr.mxu0 0.0
        %1239 = vmatpush2.msra.mxu0 0.0
        %1240 = vmatprep.subr.mxu0 0.0
        %1241 = vmatpush2.msra.mxu0 0.0
        %1242 = vmatprep.subr.mxu0 0.0
        %1243 = vmatpush2.msra.mxu0 0.0
        %1244 = vmatprep.subr.mxu0 0.0
        %1245 = vmatpush2.msra.mxu0 0.0
        %1246 = vmatprep.mubr.f32.mxu0 0.0
        %1247 = vmatmul.mubr.f32.gmra.mxu0 %v1180
        %v1248 = vpop.f32.mrf.mxu0
        %v1249 = vadd.f32 0.0, %v1248
        %v1250 = vpop.f32.mrf.mxu0
        %1251 = vdwg.mxu0
        %1252 = vrot.lane.b32.xlu0 %v652, 56
        %v1253 = vpop.permute.xlu0 %1252
        %v1256 = vsel %vm668, %v1175, 0
        %1258 = vmatprep.subr.mxu0 0.0
        %1259 = vmatpush1.msra.mxu0 0.0
        %1260 = vmatprep.subr.mxu0 0.0
        %1261 = vmatpush1.msra.mxu0 0.0
        %1262 = vmatprep.subr.mxu0 0.0
        %1263 = vmatpush1.msra.mxu0 0.0
        %1264 = vmatprep.subr.mxu0 0.0
        %1265 = vmatpush1.msra.mxu0 0.0
        %1266 = vmatprep.subr.mxu0 0.0
        %1267 = vmatpush1.msra.mxu0 0.0
        %1268 = vmatprep.subr.mxu0 0.0
        %1269 = vmatpush1.msra.mxu0 0.0
        %1270 = vmatprep.subr.mxu0 0.0
        %1271 = vmatpush1.msra.mxu0 0.0
        %1272 = vmatprep.subr.mxu0 0.0
        %1273 = vmatpush1.msra.mxu0 0.0
        %1274 = vmatprep.subr.mxu0 0.0
        %1275 = vmatpush1.msra.mxu0 0.0
        %1276 = vmatprep.subr.mxu0 0.0
        %1277 = vmatpush1.msra.mxu0 0.0
        %1278 = vmatprep.subr.mxu0 0.0
        %1279 = vmatpush1.msra.mxu0 0.0
        %1280 = vmatprep.subr.mxu0 0.0
        %1281 = vmatpush1.msra.mxu0 0.0
        %1282 = vmatprep.subr.mxu0 0.0
        %1283 = vmatpush1.msra.mxu0 0.0
        %1284 = vmatprep.subr.mxu0 0.0
        %1285 = vmatpush1.msra.mxu0 0.0
        %1286 = vmatprep.subr.mxu0 0.0
        %1287 = vmatpush1.msra.mxu0 0.0
        %1288 = vmatprep.subr.mxu0 0.0
        %1289 = vmatpush1.msra.mxu0 %v1253
        %1290 = vmatprep.subr.mxu0 0.0
        %1291 = vmatpush2.msra.mxu0 0.0
        %1292 = vmatprep.subr.mxu0 0.0
        %1293 = vmatpush2.msra.mxu0 0.0
        %1294 = vmatprep.subr.mxu0 0.0
        %1295 = vmatpush2.msra.mxu0 0.0
        %1296 = vmatprep.subr.mxu0 0.0
        %1297 = vmatpush2.msra.mxu0 0.0
        %1298 = vmatprep.subr.mxu0 0.0
        %1299 = vmatpush2.msra.mxu0 0.0
        %1300 = vmatprep.subr.mxu0 0.0
        %1301 = vmatpush2.msra.mxu0 0.0
        %1302 = vmatprep.subr.mxu0 0.0
        %1303 = vmatpush2.msra.mxu0 0.0
        %1304 = vmatprep.subr.mxu0 0.0
        %1305 = vmatpush2.msra.mxu0 0.0
        %1306 = vmatprep.subr.mxu0 0.0
        %1307 = vmatpush2.msra.mxu0 0.0
        %1308 = vmatprep.subr.mxu0 0.0
        %1309 = vmatpush2.msra.mxu0 0.0
        %1310 = vmatprep.subr.mxu0 0.0
        %1311 = vmatpush2.msra.mxu0 0.0
        %1312 = vmatprep.subr.mxu0 0.0
        %1313 = vmatpush2.msra.mxu0 0.0
        %1314 = vmatprep.subr.mxu0 0.0
        %1315 = vmatpush2.msra.mxu0 0.0
        %1316 = vmatprep.subr.mxu0 0.0
        %1317 = vmatpush2.msra.mxu0 0.0
        %1318 = vmatprep.subr.mxu0 0.0
        %1319 = vmatpush2.msra.mxu0 0.0
        %1320 = vmatprep.subr.mxu0 0.0
        %1321 = vmatpush2.msra.mxu0 0.0
        %1322 = vmatprep.mubr.f32.mxu0 0.0
        %1323 = vmatmul.mubr.f32.gmra.mxu0 %v1256
        %v1324 = vpop.f32.mrf.mxu0
        %v1325 = vadd.f32 0.0, %v1324
        %v1326 = vpop.f32.mrf.mxu0
        %1327 = vdwg.mxu0
        %1328 = vrot.lane.b32.xlu0 %v631, 112
        %v1329 = vpop.permute.xlu0 %1328
        %1330 = vrot.lane.b32.xlu0 %v641, 80
        %v1331 = vpop.permute.xlu0 %1330
        %v1332 = vsel %vm668, %v1329, 0
        %v1334 = vsel %vm668, %v1331, 0
        %1336 = vmatprep.subr.mxu0 0.0
        %1337 = vmatpush1.xpose.msra.mxu0 0.0
        %1338 = vmatprep.subr.mxu0 0.0
        %1339 = vmatpush1.xpose.msra.mxu0 0.0
        %1340 = vmatprep.subr.mxu0 0.0
        %1341 = vmatpush1.xpose.msra.mxu0 0.0
        %1342 = vmatprep.subr.mxu0 0.0
        %1343 = vmatpush1.xpose.msra.mxu0 0.0
        %1344 = vmatprep.subr.mxu0 0.0
        %1345 = vmatpush1.xpose.msra.mxu0 0.0
        %1346 = vmatprep.subr.mxu0 0.0
        %1347 = vmatpush1.xpose.msra.mxu0 0.0
        %1348 = vmatprep.subr.mxu0 0.0
        %1349 = vmatpush1.xpose.msra.mxu0 0.0
        %1350 = vmatprep.subr.mxu0 0.0
        %1351 = vmatpush1.xpose.msra.mxu0 0.0
        %1352 = vmatprep.subr.mxu0 0.0
        %1353 = vmatpush1.xpose.msra.mxu0 0.0
        %1354 = vmatprep.subr.mxu0 0.0
        %1355 = vmatpush1.xpose.msra.mxu0 0.0
        %1356 = vmatprep.subr.mxu0 0.0
        %1357 = vmatpush1.xpose.msra.mxu0 0.0
        %1358 = vmatprep.subr.mxu0 0.0
        %1359 = vmatpush1.xpose.msra.mxu0 0.0
        %1360 = vmatprep.subr.mxu0 0.0
        %1361 = vmatpush1.xpose.msra.mxu0 0.0
        %1362 = vmatprep.subr.mxu0 0.0
        %1363 = vmatpush1.xpose.msra.mxu0 0.0
        %1364 = vmatprep.subr.mxu0 0.0
        %1365 = vmatpush1.xpose.msra.mxu0 0.0
        %1366 = vmatprep.subr.mxu0 0.0
        %1367 = vmatpush1.xpose.msra.mxu0 %v1334
        %1368 = vmatprep.subr.mxu0 0.0
        %1369 = vmatpush2.xpose.msra.mxu0 0.0
        %1370 = vmatprep.subr.mxu0 0.0
        %1371 = vmatpush2.xpose.msra.mxu0 0.0
        %1372 = vmatprep.subr.mxu0 0.0
        %1373 = vmatpush2.xpose.msra.mxu0 0.0
        %1374 = vmatprep.subr.mxu0 0.0
        %1375 = vmatpush2.xpose.msra.mxu0 0.0
        %1376 = vmatprep.subr.mxu0 0.0
        %1377 = vmatpush2.xpose.msra.mxu0 0.0
        %1378 = vmatprep.subr.mxu0 0.0
        %1379 = vmatpush2.xpose.msra.mxu0 0.0
        %1380 = vmatprep.subr.mxu0 0.0
        %1381 = vmatpush2.xpose.msra.mxu0 0.0
        %1382 = vmatprep.subr.mxu0 0.0
        %1383 = vmatpush2.xpose.msra.mxu0 0.0
        %1384 = vmatprep.subr.mxu0 0.0
        %1385 = vmatpush2.xpose.msra.mxu0 0.0
        %1386 = vmatprep.subr.mxu0 0.0
        %1387 = vmatpush2.xpose.msra.mxu0 0.0
        %1388 = vmatprep.subr.mxu0 0.0
        %1389 = vmatpush2.xpose.msra.mxu0 0.0
        %1390 = vmatprep.subr.mxu0 0.0
        %1391 = vmatpush2.xpose.msra.mxu0 0.0
        %1392 = vmatprep.subr.mxu0 0.0
        %1393 = vmatpush2.xpose.msra.mxu0 0.0
        %1394 = vmatprep.subr.mxu0 0.0
        %1395 = vmatpush2.xpose.msra.mxu0 0.0
        %1396 = vmatprep.subr.mxu0 0.0
        %1397 = vmatpush2.xpose.msra.mxu0 0.0
        %1398 = vmatprep.subr.mxu0 0.0
        %1399 = vmatpush2.xpose.msra.mxu0 0.0
        %1400 = vmatprep.mubr.f32.mxu0 0.0
        %1401 = vmatmul.mubr.f32.gmra.mxu0 %v1332
        %v1402 = vpop.f32.mrf.mxu0
        %v1403 = vadd.f32 %v658, %v1402
        %v1404 = vpop.f32.mrf.mxu0
        %1405 = vdwg.mxu0
        %1406 = vrot.lane.b32.xlu0 %v632, 112
        %v1407 = vpop.permute.xlu0 %1406
        %1408 = vrot.lane.b32.xlu0 %v642, 80
        %v1409 = vpop.permute.xlu0 %1408
        %v1410 = vsel %vm668, %v1407, 0
        %v1412 = vsel %vm668, %v1409, 0
        %1414 = vmatprep.subr.mxu0 0.0
        %1415 = vmatpush1.xpose.msra.mxu0 0.0
        %1416 = vmatprep.subr.mxu0 0.0
        %1417 = vmatpush1.xpose.msra.mxu0 0.0
        %1418 = vmatprep.subr.mxu0 0.0
        %1419 = vmatpush1.xpose.msra.mxu0 0.0
        %1420 = vmatprep.subr.mxu0 0.0
        %1421 = vmatpush1.xpose.msra.mxu0 0.0
        %1422 = vmatprep.subr.mxu0 0.0
        %1423 = vmatpush1.xpose.msra.mxu0 0.0
        %1424 = vmatprep.subr.mxu0 0.0
        %1425 = vmatpush1.xpose.msra.mxu0 0.0
        %1426 = vmatprep.subr.mxu0 0.0
        %1427 = vmatpush1.xpose.msra.mxu0 0.0
        %1428 = vmatprep.subr.mxu0 0.0
        %1429 = vmatpush1.xpose.msra.mxu0 0.0
        %1430 = vmatprep.subr.mxu0 0.0
        %1431 = vmatpush1.xpose.msra.mxu0 0.0
        %1432 = vmatprep.subr.mxu0 0.0
        %1433 = vmatpush1.xpose.msra.mxu0 0.0
        %1434 = vmatprep.subr.mxu0 0.0
        %1435 = vmatpush1.xpose.msra.mxu0 0.0
        %1436 = vmatprep.subr.mxu0 0.0
        %1437 = vmatpush1.xpose.msra.mxu0 0.0
        %1438 = vmatprep.subr.mxu0 0.0
        %1439 = vmatpush1.xpose.msra.mxu0 0.0
        %1440 = vmatprep.subr.mxu0 0.0
        %1441 = vmatpush1.xpose.msra.mxu0 0.0
        %1442 = vmatprep.subr.mxu0 0.0
        %1443 = vmatpush1.xpose.msra.mxu0 0.0
        %1444 = vmatprep.subr.mxu0 0.0
        %1445 = vmatpush1.xpose.msra.mxu0 %v1412
        %1446 = vmatprep.subr.mxu0 0.0
        %1447 = vmatpush2.xpose.msra.mxu0 0.0
        %1448 = vmatprep.subr.mxu0 0.0
        %1449 = vmatpush2.xpose.msra.mxu0 0.0
        %1450 = vmatprep.subr.mxu0 0.0
        %1451 = vmatpush2.xpose.msra.mxu0 0.0
        %1452 = vmatprep.subr.mxu0 0.0
        %1453 = vmatpush2.xpose.msra.mxu0 0.0
        %1454 = vmatprep.subr.mxu0 0.0
        %1455 = vmatpush2.xpose.msra.mxu0 0.0
        %1456 = vmatprep.subr.mxu0 0.0
        %1457 = vmatpush2.xpose.msra.mxu0 0.0
        %1458 = vmatprep.subr.mxu0 0.0
        %1459 = vmatpush2.xpose.msra.mxu0 0.0
        %1460 = vmatprep.subr.mxu0 0.0
        %1461 = vmatpush2.xpose.msra.mxu0 0.0
        %1462 = vmatprep.subr.mxu0 0.0
        %1463 = vmatpush2.xpose.msra.mxu0 0.0
        %1464 = vmatprep.subr.mxu0 0.0
        %1465 = vmatpush2.xpose.msra.mxu0 0.0
        %1466 = vmatprep.subr.mxu0 0.0
        %1467 = vmatpush2.xpose.msra.mxu0 0.0
        %1468 = vmatprep.subr.mxu0 0.0
        %1469 = vmatpush2.xpose.msra.mxu0 0.0
        %1470 = vmatprep.subr.mxu0 0.0
        %1471 = vmatpush2.xpose.msra.mxu0 0.0
        %1472 = vmatprep.subr.mxu0 0.0
        %1473 = vmatpush2.xpose.msra.mxu0 0.0
        %1474 = vmatprep.subr.mxu0 0.0
        %1475 = vmatpush2.xpose.msra.mxu0 0.0
        %1476 = vmatprep.subr.mxu0 0.0
        %1477 = vmatpush2.xpose.msra.mxu0 0.0
        %1478 = vmatprep.mubr.f32.mxu0 0.0
        %1479 = vmatmul.mubr.f32.gmra.mxu0 %v1410
        %v1480 = vpop.f32.mrf.mxu0
        %v1481 = vadd.f32 %v662, %v1480
        %v1482 = vpop.f32.mrf.mxu0
        %1483 = vdwg.mxu0
        %v1484 = vsel %vm668, %v1403, -inf
        %1485 = vmax.xlane.f32.xlu0 %v1484
        %v1486 = vpop.xlane.xlu0 %1485
        %v1487 = vsel %vm668, %v1481, -inf
        %1488 = vmax.xlane.f32.xlu0 %v1487
        %v1489 = vpop.xlane.xlu0 %1488
        %v1490 = vsub.f32 %v1403, %v1486
        %v1491 = vsub.f32 %v1481, %v1489
        %v1492 = vmul.f32 %v1490, 1.442695
        %v1493 = vpow.pop %v1492
        %v1494 = vmul.f32 %v1491, 1.442695
        %v1495 = vpow.pop %v1494
        %v1496 = vsel %vm668, %v1493, 0.0
        %1497 = vadd.xlane.f32.xlu0 %v1496
        %v1498 = vpop.xlane.xlu0 %1497
        %v1499 = vsel %vm668, %v1495, 0.0
        %1500 = vadd.xlane.f32.xlu0 %v1499
        %v1501 = vpop.xlane.xlu0 %1500
        %v1502 = vrcp.pop %v1498
        %v1503 = vrcp.pop %v1501
        %v1504 = vmul.f32 %v1493, %v1502
        %v1505 = vmul.f32 %v1495, %v1503
        %1506 = vrot.lane.b32.xlu0 %v651, 48
        %v1507 = vpop.permute.xlu0 %1506
        %v1510 = vsel %vm668, %v1504, 0
        %1512 = vmatprep.subr.mxu0 0.0
        %1513 = vmatpush1.msra.mxu0 0.0
        %1514 = vmatprep.subr.mxu0 0.0
        %1515 = vmatpush1.msra.mxu0 0.0
        %1516 = vmatprep.subr.mxu0 0.0
        %1517 = vmatpush1.msra.mxu0 0.0
        %1518 = vmatprep.subr.mxu0 0.0
        %1519 = vmatpush1.msra.mxu0 0.0
        %1520 = vmatprep.subr.mxu0 0.0
        %1521 = vmatpush1.msra.mxu0 0.0
        %1522 = vmatprep.subr.mxu0 0.0
        %1523 = vmatpush1.msra.mxu0 0.0
        %1524 = vmatprep.subr.mxu0 0.0
        %1525 = vmatpush1.msra.mxu0 0.0
        %1526 = vmatprep.subr.mxu0 0.0
        %1527 = vmatpush1.msra.mxu0 0.0
        %1528 = vmatprep.subr.mxu0 0.0
        %1529 = vmatpush1.msra.mxu0 0.0
        %1530 = vmatprep.subr.mxu0 0.0
        %1531 = vmatpush1.msra.mxu0 0.0
        %1532 = vmatprep.subr.mxu0 0.0
        %1533 = vmatpush1.msra.mxu0 0.0
        %1534 = vmatprep.subr.mxu0 0.0
        %1535 = vmatpush1.msra.mxu0 0.0
        %1536 = vmatprep.subr.mxu0 0.0
        %1537 = vmatpush1.msra.mxu0 0.0
        %1538 = vmatprep.subr.mxu0 0.0
        %1539 = vmatpush1.msra.mxu0 0.0
        %1540 = vmatprep.subr.mxu0 0.0
        %1541 = vmatpush1.msra.mxu0 0.0
        %1542 = vmatprep.subr.mxu0 0.0
        %1543 = vmatpush1.msra.mxu0 %v1507
        %1544 = vmatprep.subr.mxu0 0.0
        %1545 = vmatpush2.msra.mxu0 0.0
        %1546 = vmatprep.subr.mxu0 0.0
        %1547 = vmatpush2.msra.mxu0 0.0
        %1548 = vmatprep.subr.mxu0 0.0
        %1549 = vmatpush2.msra.mxu0 0.0
        %1550 = vmatprep.subr.mxu0 0.0
        %1551 = vmatpush2.msra.mxu0 0.0
        %1552 = vmatprep.subr.mxu0 0.0
        %1553 = vmatpush2.msra.mxu0 0.0
        %1554 = vmatprep.subr.mxu0 0.0
        %1555 = vmatpush2.msra.mxu0 0.0
        %1556 = vmatprep.subr.mxu0 0.0
        %1557 = vmatpush2.msra.mxu0 0.0
        %1558 = vmatprep.subr.mxu0 0.0
        %1559 = vmatpush2.msra.mxu0 0.0
        %1560 = vmatprep.subr.mxu0 0.0
        %1561 = vmatpush2.msra.mxu0 0.0
        %1562 = vmatprep.subr.mxu0 0.0
        %1563 = vmatpush2.msra.mxu0 0.0
        %1564 = vmatprep.subr.mxu0 0.0
        %1565 = vmatpush2.msra.mxu0 0.0
        %1566 = vmatprep.subr.mxu0 0.0
        %1567 = vmatpush2.msra.mxu0 0.0
        %1568 = vmatprep.subr.mxu0 0.0
        %1569 = vmatpush2.msra.mxu0 0.0
        %1570 = vmatprep.subr.mxu0 0.0
        %1571 = vmatpush2.msra.mxu0 0.0
        %1572 = vmatprep.subr.mxu0 0.0
        %1573 = vmatpush2.msra.mxu0 0.0
        %1574 = vmatprep.subr.mxu0 0.0
        %1575 = vmatpush2.msra.mxu0 0.0
        %1576 = vmatprep.mubr.f32.mxu0 0.0
        %1577 = vmatmul.mubr.f32.gmra.mxu0 %v1510
        %v1578 = vpop.f32.mrf.mxu0
        %v1579 = vadd.f32 0.0, %v1578
        %v1580 = vpop.f32.mrf.mxu0
        %1581 = vdwg.mxu0
        %1582 = vrot.lane.b32.xlu0 %v652, 48
        %v1583 = vpop.permute.xlu0 %1582
        %v1586 = vsel %vm668, %v1505, 0
        %1588 = vmatprep.subr.mxu0 0.0
        %1589 = vmatpush1.msra.mxu0 0.0
        %1590 = vmatprep.subr.mxu0 0.0
        %1591 = vmatpush1.msra.mxu0 0.0
        %1592 = vmatprep.subr.mxu0 0.0
        %1593 = vmatpush1.msra.mxu0 0.0
        %1594 = vmatprep.subr.mxu0 0.0
        %1595 = vmatpush1.msra.mxu0 0.0
        %1596 = vmatprep.subr.mxu0 0.0
        %1597 = vmatpush1.msra.mxu0 0.0
        %1598 = vmatprep.subr.mxu0 0.0
        %1599 = vmatpush1.msra.mxu0 0.0
        %1600 = vmatprep.subr.mxu0 0.0
        %1601 = vmatpush1.msra.mxu0 0.0
        %1602 = vmatprep.subr.mxu0 0.0
        %1603 = vmatpush1.msra.mxu0 0.0
        %1604 = vmatprep.subr.mxu0 0.0
        %1605 = vmatpush1.msra.mxu0 0.0
        %1606 = vmatprep.subr.mxu0 0.0
        %1607 = vmatpush1.msra.mxu0 0.0
        %1608 = vmatprep.subr.mxu0 0.0
        %1609 = vmatpush1.msra.mxu0 0.0
        %1610 = vmatprep.subr.mxu0 0.0
        %1611 = vmatpush1.msra.mxu0 0.0
        %1612 = vmatprep.subr.mxu0 0.0
        %1613 = vmatpush1.msra.mxu0 0.0
        %1614 = vmatprep.subr.mxu0 0.0
        %1615 = vmatpush1.msra.mxu0 0.0
        %1616 = vmatprep.subr.mxu0 0.0
        %1617 = vmatpush1.msra.mxu0 0.0
        %1618 = vmatprep.subr.mxu0 0.0
        %1619 = vmatpush1.msra.mxu0 %v1583
        %1620 = vmatprep.subr.mxu0 0.0
        %1621 = vmatpush2.msra.mxu0 0.0
        %1622 = vmatprep.subr.mxu0 0.0
        %1623 = vmatpush2.msra.mxu0 0.0
        %1624 = vmatprep.subr.mxu0 0.0
        %1625 = vmatpush2.msra.mxu0 0.0
        %1626 = vmatprep.subr.mxu0 0.0
        %1627 = vmatpush2.msra.mxu0 0.0
        %1628 = vmatprep.subr.mxu0 0.0
        %1629 = vmatpush2.msra.mxu0 0.0
        %1630 = vmatprep.subr.mxu0 0.0
        %1631 = vmatpush2.msra.mxu0 0.0
        %1632 = vmatprep.subr.mxu0 0.0
        %1633 = vmatpush2.msra.mxu0 0.0
        %1634 = vmatprep.subr.mxu0 0.0
        %1635 = vmatpush2.msra.mxu0 0.0
        %1636 = vmatprep.subr.mxu0 0.0
        %1637 = vmatpush2.msra.mxu0 0.0
        %1638 = vmatprep.subr.mxu0 0.0
        %1639 = vmatpush2.msra.mxu0 0.0
        %1640 = vmatprep.subr.mxu0 0.0
        %1641 = vmatpush2.msra.mxu0 0.0
        %1642 = vmatprep.subr.mxu0 0.0
        %1643 = vmatpush2.msra.mxu0 0.0
        %1644 = vmatprep.subr.mxu0 0.0
        %1645 = vmatpush2.msra.mxu0 0.0
        %1646 = vmatprep.subr.mxu0 0.0
        %1647 = vmatpush2.msra.mxu0 0.0
        %1648 = vmatprep.subr.mxu0 0.0
        %1649 = vmatpush2.msra.mxu0 0.0
        %1650 = vmatprep.subr.mxu0 0.0
        %1651 = vmatpush2.msra.mxu0 0.0
        %1652 = vmatprep.mubr.f32.mxu0 0.0
        %1653 = vmatmul.mubr.f32.gmra.mxu0 %v1586
        %v1654 = vpop.f32.mrf.mxu0
        %v1655 = vadd.f32 0.0, %v1654
        %v1656 = vpop.f32.mrf.mxu0
        %1657 = vdwg.mxu0
        %1658 = vrot.lane.b32.xlu0 %v631, 104
        %v1659 = vpop.permute.xlu0 %1658
        %1660 = vrot.lane.b32.xlu0 %v641, 72
        %v1661 = vpop.permute.xlu0 %1660
        %v1662 = vsel %vm668, %v1659, 0
        %v1664 = vsel %vm668, %v1661, 0
        %1666 = vmatprep.subr.mxu0 0.0
        %1667 = vmatpush1.xpose.msra.mxu0 0.0
        %1668 = vmatprep.subr.mxu0 0.0
        %1669 = vmatpush1.xpose.msra.mxu0 0.0
        %1670 = vmatprep.subr.mxu0 0.0
        %1671 = vmatpush1.xpose.msra.mxu0 0.0
        %1672 = vmatprep.subr.mxu0 0.0
        %1673 = vmatpush1.xpose.msra.mxu0 0.0
        %1674 = vmatprep.subr.mxu0 0.0
        %1675 = vmatpush1.xpose.msra.mxu0 0.0
        %1676 = vmatprep.subr.mxu0 0.0
        %1677 = vmatpush1.xpose.msra.mxu0 0.0
        %1678 = vmatprep.subr.mxu0 0.0
        %1679 = vmatpush1.xpose.msra.mxu0 0.0
        %1680 = vmatprep.subr.mxu0 0.0
        %1681 = vmatpush1.xpose.msra.mxu0 0.0
        %1682 = vmatprep.subr.mxu0 0.0
        %1683 = vmatpush1.xpose.msra.mxu0 0.0
        %1684 = vmatprep.subr.mxu0 0.0
        %1685 = vmatpush1.xpose.msra.mxu0 0.0
        %1686 = vmatprep.subr.mxu0 0.0
        %1687 = vmatpush1.xpose.msra.mxu0 0.0
        %1688 = vmatprep.subr.mxu0 0.0
        %1689 = vmatpush1.xpose.msra.mxu0 0.0
        %1690 = vmatprep.subr.mxu0 0.0
        %1691 = vmatpush1.xpose.msra.mxu0 0.0
        %1692 = vmatprep.subr.mxu0 0.0
        %1693 = vmatpush1.xpose.msra.mxu0 0.0
        %1694 = vmatprep.subr.mxu0 0.0
        %1695 = vmatpush1.xpose.msra.mxu0 0.0
        %1696 = vmatprep.subr.mxu0 0.0
        %1697 = vmatpush1.xpose.msra.mxu0 %v1664
        %1698 = vmatprep.subr.mxu0 0.0
        %1699 = vmatpush2.xpose.msra.mxu0 0.0
        %1700 = vmatprep.subr.mxu0 0.0
        %1701 = vmatpush2.xpose.msra.mxu0 0.0
        %1702 = vmatprep.subr.mxu0 0.0
        %1703 = vmatpush2.xpose.msra.mxu0 0.0
        %1704 = vmatprep.subr.mxu0 0.0
        %1705 = vmatpush2.xpose.msra.mxu0 0.0
        %1706 = vmatprep.subr.mxu0 0.0
        %1707 = vmatpush2.xpose.msra.mxu0 0.0
        %1708 = vmatprep.subr.mxu0 0.0
        %1709 = vmatpush2.xpose.msra.mxu0 0.0
        %1710 = vmatprep.subr.mxu0 0.0
        %1711 = vmatpush2.xpose.msra.mxu0 0.0
        %1712 = vmatprep.subr.mxu0 0.0
        %1713 = vmatpush2.xpose.msra.mxu0 0.0
        %1714 = vmatprep.subr.mxu0 0.0
        %1715 = vmatpush2.xpose.msra.mxu0 0.0
        %1716 = vmatprep.subr.mxu0 0.0
        %1717 = vmatpush2.xpose.msra.mxu0 0.0
        %1718 = vmatprep.subr.mxu0 0.0
        %1719 = vmatpush2.xpose.msra.mxu0 0.0
        %1720 = vmatprep.subr.mxu0 0.0
        %1721 = vmatpush2.xpose.msra.mxu0 0.0
        %1722 = vmatprep.subr.mxu0 0.0
        %1723 = vmatpush2.xpose.msra.mxu0 0.0
        %1724 = vmatprep.subr.mxu0 0.0
        %1725 = vmatpush2.xpose.msra.mxu0 0.0
        %1726 = vmatprep.subr.mxu0 0.0
        %1727 = vmatpush2.xpose.msra.mxu0 0.0
        %1728 = vmatprep.subr.mxu0 0.0
        %1729 = vmatpush2.xpose.msra.mxu0 0.0
        %1730 = vmatprep.mubr.f32.mxu0 0.0
        %1731 = vmatmul.mubr.f32.gmra.mxu0 %v1662
        %v1732 = vpop.f32.mrf.mxu0
        %v1733 = vadd.f32 %v658, %v1732
        %v1734 = vpop.f32.mrf.mxu0
        %1735 = vdwg.mxu0
        %1736 = vrot.lane.b32.xlu0 %v632, 104
        %v1737 = vpop.permute.xlu0 %1736
        %1738 = vrot.lane.b32.xlu0 %v642, 72
        %v1739 = vpop.permute.xlu0 %1738
        %v1740 = vsel %vm668, %v1737, 0
        %v1742 = vsel %vm668, %v1739, 0
        %1744 = vmatprep.subr.mxu0 0.0
        %1745 = vmatpush1.xpose.msra.mxu0 0.0
        %1746 = vmatprep.subr.mxu0 0.0
        %1747 = vmatpush1.xpose.msra.mxu0 0.0
        %1748 = vmatprep.subr.mxu0 0.0
        %1749 = vmatpush1.xpose.msra.mxu0 0.0
        %1750 = vmatprep.subr.mxu0 0.0
        %1751 = vmatpush1.xpose.msra.mxu0 0.0
        %1752 = vmatprep.subr.mxu0 0.0
        %1753 = vmatpush1.xpose.msra.mxu0 0.0
        %1754 = vmatprep.subr.mxu0 0.0
        %1755 = vmatpush1.xpose.msra.mxu0 0.0
        %1756 = vmatprep.subr.mxu0 0.0
        %1757 = vmatpush1.xpose.msra.mxu0 0.0
        %1758 = vmatprep.subr.mxu0 0.0
        %1759 = vmatpush1.xpose.msra.mxu0 0.0
        %1760 = vmatprep.subr.mxu0 0.0
        %1761 = vmatpush1.xpose.msra.mxu0 0.0
        %1762 = vmatprep.subr.mxu0 0.0
        %1763 = vmatpush1.xpose.msra.mxu0 0.0
        %1764 = vmatprep.subr.mxu0 0.0
        %1765 = vmatpush1.xpose.msra.mxu0 0.0
        %1766 = vmatprep.subr.mxu0 0.0
        %1767 = vmatpush1.xpose.msra.mxu0 0.0
        %1768 = vmatprep.subr.mxu0 0.0
        %1769 = vmatpush1.xpose.msra.mxu0 0.0
        %1770 = vmatprep.subr.mxu0 0.0
        %1771 = vmatpush1.xpose.msra.mxu0 0.0
        %1772 = vmatprep.subr.mxu0 0.0
        %1773 = vmatpush1.xpose.msra.mxu0 0.0
        %1774 = vmatprep.subr.mxu0 0.0
        %1775 = vmatpush1.xpose.msra.mxu0 %v1742
        %1776 = vmatprep.subr.mxu0 0.0
        %1777 = vmatpush2.xpose.msra.mxu0 0.0
        %1778 = vmatprep.subr.mxu0 0.0
        %1779 = vmatpush2.xpose.msra.mxu0 0.0
        %1780 = vmatprep.subr.mxu0 0.0
        %1781 = vmatpush2.xpose.msra.mxu0 0.0
        %1782 = vmatprep.subr.mxu0 0.0
        %1783 = vmatpush2.xpose.msra.mxu0 0.0
        %1784 = vmatprep.subr.mxu0 0.0
        %1785 = vmatpush2.xpose.msra.mxu0 0.0
        %1786 = vmatprep.subr.mxu0 0.0
        %1787 = vmatpush2.xpose.msra.mxu0 0.0
        %1788 = vmatprep.subr.mxu0 0.0
        %1789 = vmatpush2.xpose.msra.mxu0 0.0
        %1790 = vmatprep.subr.mxu0 0.0
        %1791 = vmatpush2.xpose.msra.mxu0 0.0
        %1792 = vmatprep.subr.mxu0 0.0
        %1793 = vmatpush2.xpose.msra.mxu0 0.0
        %1794 = vmatprep.subr.mxu0 0.0
        %1795 = vmatpush2.xpose.msra.mxu0 0.0
        %1796 = vmatprep.subr.mxu0 0.0
        %1797 = vmatpush2.xpose.msra.mxu0 0.0
        %1798 = vmatprep.subr.mxu0 0.0
        %1799 = vmatpush2.xpose.msra.mxu0 0.0
        %1800 = vmatprep.subr.mxu0 0.0
        %1801 = vmatpush2.xpose.msra.mxu0 0.0
        %1802 = vmatprep.subr.mxu0 0.0
        %1803 = vmatpush2.xpose.msra.mxu0 0.0
        %1804 = vmatprep.subr.mxu0 0.0
        %1805 = vmatpush2.xpose.msra.mxu0 0.0
        %1806 = vmatprep.subr.mxu0 0.0
        %1807 = vmatpush2.xpose.msra.mxu0 0.0
        %1808 = vmatprep.mubr.f32.mxu0 0.0
        %1809 = vmatmul.mubr.f32.gmra.mxu0 %v1740
        %v1810 = vpop.f32.mrf.mxu0
        %v1811 = vadd.f32 %v662, %v1810
        %v1812 = vpop.f32.mrf.mxu0
        %1813 = vdwg.mxu0
        %v1814 = vsel %vm668, %v1733, -inf
        %1815 = vmax.xlane.f32.xlu0 %v1814
        %v1816 = vpop.xlane.xlu0 %1815
        %v1817 = vsel %vm668, %v1811, -inf
        %1818 = vmax.xlane.f32.xlu0 %v1817
        %v1819 = vpop.xlane.xlu0 %1818
        %v1820 = vsub.f32 %v1733, %v1816
        %v1821 = vsub.f32 %v1811, %v1819
        %v1822 = vmul.f32 %v1820, 1.442695
        %v1823 = vpow.pop %v1822
        %v1824 = vmul.f32 %v1821, 1.442695
        %v1825 = vpow.pop %v1824
        %v1826 = vsel %vm668, %v1823, 0.0
        %1827 = vadd.xlane.f32.xlu0 %v1826
        %v1828 = vpop.xlane.xlu0 %1827
        %v1829 = vsel %vm668, %v1825, 0.0
        %1830 = vadd.xlane.f32.xlu0 %v1829
        %v1831 = vpop.xlane.xlu0 %1830
        %v1832 = vrcp.pop %v1828
        %v1833 = vrcp.pop %v1831
        %v1834 = vmul.f32 %v1823, %v1832
        %v1835 = vmul.f32 %v1825, %v1833
        %1836 = vrot.lane.b32.xlu0 %v651, 40
        %v1837 = vpop.permute.xlu0 %1836
        %v1840 = vsel %vm668, %v1834, 0
        %1842 = vmatprep.subr.mxu0 0.0
        %1843 = vmatpush1.msra.mxu0 0.0
        %1844 = vmatprep.subr.mxu0 0.0
        %1845 = vmatpush1.msra.mxu0 0.0
        %1846 = vmatprep.subr.mxu0 0.0
        %1847 = vmatpush1.msra.mxu0 0.0
        %1848 = vmatprep.subr.mxu0 0.0
        %1849 = vmatpush1.msra.mxu0 0.0
        %1850 = vmatprep.subr.mxu0 0.0
        %1851 = vmatpush1.msra.mxu0 0.0
        %1852 = vmatprep.subr.mxu0 0.0
        %1853 = vmatpush1.msra.mxu0 0.0
        %1854 = vmatprep.subr.mxu0 0.0
        %1855 = vmatpush1.msra.mxu0 0.0
        %1856 = vmatprep.subr.mxu0 0.0
        %1857 = vmatpush1.msra.mxu0 0.0
        %1858 = vmatprep.subr.mxu0 0.0
        %1859 = vmatpush1.msra.mxu0 0.0
        %1860 = vmatprep.subr.mxu0 0.0
        %1861 = vmatpush1.msra.mxu0 0.0
        %1862 = vmatprep.subr.mxu0 0.0
        %1863 = vmatpush1.msra.mxu0 0.0
        %1864 = vmatprep.subr.mxu0 0.0
        %1865 = vmatpush1.msra.mxu0 0.0
        %1866 = vmatprep.subr.mxu0 0.0
        %1867 = vmatpush1.msra.mxu0 0.0
        %1868 = vmatprep.subr.mxu0 0.0
        %1869 = vmatpush1.msra.mxu0 0.0
        %1870 = vmatprep.subr.mxu0 0.0
        %1871 = vmatpush1.msra.mxu0 0.0
        %1872 = vmatprep.subr.mxu0 0.0
        %1873 = vmatpush1.msra.mxu0 %v1837
        %1874 = vmatprep.subr.mxu0 0.0
        %1875 = vmatpush2.msra.mxu0 0.0
        %1876 = vmatprep.subr.mxu0 0.0
        %1877 = vmatpush2.msra.mxu0 0.0
        %1878 = vmatprep.subr.mxu0 0.0
        %1879 = vmatpush2.msra.mxu0 0.0
        %1880 = vmatprep.subr.mxu0 0.0
        %1881 = vmatpush2.msra.mxu0 0.0
        %1882 = vmatprep.subr.mxu0 0.0
        %1883 = vmatpush2.msra.mxu0 0.0
        %1884 = vmatprep.subr.mxu0 0.0
        %1885 = vmatpush2.msra.mxu0 0.0
        %1886 = vmatprep.subr.mxu0 0.0
        %1887 = vmatpush2.msra.mxu0 0.0
        %1888 = vmatprep.subr.mxu0 0.0
        %1889 = vmatpush2.msra.mxu0 0.0
        %1890 = vmatprep.subr.mxu0 0.0
        %1891 = vmatpush2.msra.mxu0 0.0
        %1892 = vmatprep.subr.mxu0 0.0
        %1893 = vmatpush2.msra.mxu0 0.0
        %1894 = vmatprep.subr.mxu0 0.0
        %1895 = vmatpush2.msra.mxu0 0.0
        %1896 = vmatprep.subr.mxu0 0.0
        %1897 = vmatpush2.msra.mxu0 0.0
        %1898 = vmatprep.subr.mxu0 0.0
        %1899 = vmatpush2.msra.mxu0 0.0
        %1900 = vmatprep.subr.mxu0 0.0
        %1901 = vmatpush2.msra.mxu0 0.0
        %1902 = vmatprep.subr.mxu0 0.0
        %1903 = vmatpush2.msra.mxu0 0.0
        %1904 = vmatprep.subr.mxu0 0.0
        %1905 = vmatpush2.msra.mxu0 0.0
        %1906 = vmatprep.mubr.f32.mxu0 0.0
        %1907 = vmatmul.mubr.f32.gmra.mxu0 %v1840
        %v1908 = vpop.f32.mrf.mxu0
        %v1909 = vadd.f32 0.0, %v1908
        %v1910 = vpop.f32.mrf.mxu0
        %1911 = vdwg.mxu0
        %1912 = vrot.lane.b32.xlu0 %v652, 40
        %v1913 = vpop.permute.xlu0 %1912
        %v1916 = vsel %vm668, %v1835, 0
        %1918 = vmatprep.subr.mxu0 0.0
        %1919 = vmatpush1.msra.mxu0 0.0
        %1920 = vmatprep.subr.mxu0 0.0
        %1921 = vmatpush1.msra.mxu0 0.0
        %1922 = vmatprep.subr.mxu0 0.0
        %1923 = vmatpush1.msra.mxu0 0.0
        %1924 = vmatprep.subr.mxu0 0.0
        %1925 = vmatpush1.msra.mxu0 0.0
        %1926 = vmatprep.subr.mxu0 0.0
        %1927 = vmatpush1.msra.mxu0 0.0
        %1928 = vmatprep.subr.mxu0 0.0
        %1929 = vmatpush1.msra.mxu0 0.0
        %1930 = vmatprep.subr.mxu0 0.0
        %1931 = vmatpush1.msra.mxu0 0.0
        %1932 = vmatprep.subr.mxu0 0.0
        %1933 = vmatpush1.msra.mxu0 0.0
        %1934 = vmatprep.subr.mxu0 0.0
        %1935 = vmatpush1.msra.mxu0 0.0
        %1936 = vmatprep.subr.mxu0 0.0
        %1937 = vmatpush1.msra.mxu0 0.0
        %1938 = vmatprep.subr.mxu0 0.0
        %1939 = vmatpush1.msra.mxu0 0.0
        %1940 = vmatprep.subr.mxu0 0.0
        %1941 = vmatpush1.msra.mxu0 0.0
        %1942 = vmatprep.subr.mxu0 0.0
        %1943 = vmatpush1.msra.mxu0 0.0
        %1944 = vmatprep.subr.mxu0 0.0
        %1945 = vmatpush1.msra.mxu0 0.0
        %1946 = vmatprep.subr.mxu0 0.0
        %1947 = vmatpush1.msra.mxu0 0.0
        %1948 = vmatprep.subr.mxu0 0.0
        %1949 = vmatpush1.msra.mxu0 %v1913
        %1950 = vmatprep.subr.mxu0 0.0
        %1951 = vmatpush2.msra.mxu0 0.0
        %1952 = vmatprep.subr.mxu0 0.0
        %1953 = vmatpush2.msra.mxu0 0.0
        %1954 = vmatprep.subr.mxu0 0.0
        %1955 = vmatpush2.msra.mxu0 0.0
        %1956 = vmatprep.subr.mxu0 0.0
        %1957 = vmatpush2.msra.mxu0 0.0
        %1958 = vmatprep.subr.mxu0 0.0
        %1959 = vmatpush2.msra.mxu0 0.0
        %1960 = vmatprep.subr.mxu0 0.0
        %1961 = vmatpush2.msra.mxu0 0.0
        %1962 = vmatprep.subr.mxu0 0.0
        %1963 = vmatpush2.msra.mxu0 0.0
        %1964 = vmatprep.subr.mxu0 0.0
        %1965 = vmatpush2.msra.mxu0 0.0
        %1966 = vmatprep.subr.mxu0 0.0
        %1967 = vmatpush2.msra.mxu0 0.0
        %1968 = vmatprep.subr.mxu0 0.0
        %1969 = vmatpush2.msra.mxu0 0.0
        %1970 = vmatprep.subr.mxu0 0.0
        %1971 = vmatpush2.msra.mxu0 0.0
        %1972 = vmatprep.subr.mxu0 0.0
        %1973 = vmatpush2.msra.mxu0 0.0
        %1974 = vmatprep.subr.mxu0 0.0
        %1975 = vmatpush2.msra.mxu0 0.0
        %1976 = vmatprep.subr.mxu0 0.0
        %1977 = vmatpush2.msra.mxu0 0.0
        %1978 = vmatprep.subr.mxu0 0.0
        %1979 = vmatpush2.msra.mxu0 0.0
        %1980 = vmatprep.subr.mxu0 0.0
        %1981 = vmatpush2.msra.mxu0 0.0
        %1982 = vmatprep.mubr.f32.mxu0 0.0
        %1983 = vmatmul.mubr.f32.gmra.mxu0 %v1916
        %v1984 = vpop.f32.mrf.mxu0
        %v1985 = vadd.f32 0.0, %v1984
        %v1986 = vpop.f32.mrf.mxu0
        %1987 = vdwg.mxu0
        %1990 = vrot.lane.b32.xlu0 %v1249, 8
        %v1991 = vpop.permute.xlu0 %1990
        %1992 = vrot.lane.b32.xlu0 %v1325, 8
        %v1993 = vpop.permute.xlu0 %1992
        %1998 = vrot.lane.b32.xlu0 %v1579, 16
        %v1999 = vpop.permute.xlu0 %1998
        %2000 = vrot.lane.b32.xlu0 %v1655, 16
        %v2001 = vpop.permute.xlu0 %2000
        %2006 = vrot.lane.b32.xlu0 %v1909, 24
        %v2007 = vpop.permute.xlu0 %2006
        %2008 = vrot.lane.b32.xlu0 %v1985, 24
        %v2009 = vpop.permute.xlu0 %2008
        %v2012 = vsel %vm668, %v918, %v1991
        %v2013 = vsel %vm668, %v995, %v1993
        %vm2014 = vcmask 130048
        %v2015 = vsel %vm2014, %v2012, %v1999
        %v2016 = vsel %vm2014, %v2013, %v2001
        %vm2017 = vcmask 195584
        %v2018 = vsel %vm2017, %v2015, %v2007
        %v2019 = vsel %vm2017, %v2016, %v2009
        %v2020 = vld [vmem:[%s452] sm:$0xff]
        %v2021 = vld [vmem:[%s452 + $0x8] sm:$0xff]
        %v2022 = vld [vmem:[%s452 + $0x10] sm:$0xff]
        %v2023 = vld [vmem:[%s452 + $0x18] sm:$0xff]
        %v2025 = vsel %vm488, %v2018, 0
        %v2028 = vsel %vm488, %v2019, 0
        %2030 = vmatprep.subr.mxu0 0.0
        %2031 = vmatpush1.msra.mxu0 0.0
        %2032 = vmatprep.subr.mxu0 0.0
        %2033 = vmatpush1.msra.mxu0 0.0
        %2034 = vmatprep.subr.mxu0 0.0
        %2035 = vmatpush1.msra.mxu0 0.0
        %2036 = vmatprep.subr.mxu0 0.0
        %2037 = vmatpush1.msra.mxu0 0.0
        %2038 = vmatprep.subr.mxu0 0.0
        %2039 = vmatpush1.msra.mxu0 0.0
        %2040 = vmatprep.subr.mxu0 0.0
        %2041 = vmatpush1.msra.mxu0 0.0
        %2042 = vmatprep.subr.mxu0 0.0
        %2043 = vmatpush1.msra.mxu0 0.0
        %2044 = vmatprep.subr.mxu0 0.0
        %2045 = vmatpush1.msra.mxu0 0.0
        %2046 = vmatprep.subr.mxu0 0.0
        %2047 = vmatpush1.msra.mxu0 0.0
        %2048 = vmatprep.subr.mxu0 0.0
        %2049 = vmatpush1.msra.mxu0 0.0
        %2050 = vmatprep.subr.mxu0 0.0
        %2051 = vmatpush1.msra.mxu0 0.0
        %2052 = vmatprep.subr.mxu0 0.0
        %2053 = vmatpush1.msra.mxu0 0.0
        %2054 = vmatprep.subr.mxu0 0.0
        %2055 = vmatpush1.msra.mxu0 %v2023
        %2056 = vmatprep.subr.mxu0 0.0
        %2057 = vmatpush1.msra.mxu0 %v2022
        %2058 = vmatprep.subr.mxu0 0.0
        %2059 = vmatpush1.msra.mxu0 %v2021
        %2060 = vmatprep.subr.mxu0 0.0
        %2061 = vmatpush1.msra.mxu0 %v2020
        %2062 = vmatprep.subr.mxu0 0.0
        %2063 = vmatpush2.msra.mxu0 0.0
        %2064 = vmatprep.subr.mxu0 0.0
        %2065 = vmatpush2.msra.mxu0 0.0
        %2066 = vmatprep.subr.mxu0 0.0
        %2067 = vmatpush2.msra.mxu0 0.0
        %2068 = vmatprep.subr.mxu0 0.0
        %2069 = vmatpush2.msra.mxu0 0.0
        %2070 = vmatprep.subr.mxu0 0.0
        %2071 = vmatpush2.msra.mxu0 0.0
        %2072 = vmatprep.subr.mxu0 0.0
        %2073 = vmatpush2.msra.mxu0 0.0
        %2074 = vmatprep.subr.mxu0 0.0
        %2075 = vmatpush2.msra.mxu0 0.0
        %2076 = vmatprep.subr.mxu0 0.0
        %2077 = vmatpush2.msra.mxu0 0.0
        %2078 = vmatprep.subr.mxu0 0.0
        %2079 = vmatpush2.msra.mxu0 0.0
        %2080 = vmatprep.subr.mxu0 0.0
        %2081 = vmatpush2.msra.mxu0 0.0
        %2082 = vmatprep.subr.mxu0 0.0
        %2083 = vmatpush2.msra.mxu0 0.0
        %2084 = vmatprep.subr.mxu0 0.0
        %2085 = vmatpush2.msra.mxu0 0.0
        %2086 = vmatprep.subr.mxu0 0.0
        %2087 = vmatpush2.msra.mxu0 0.0
        %2088 = vmatprep.subr.mxu0 0.0
        %2089 = vmatpush2.msra.mxu0 0.0
        %2090 = vmatprep.subr.mxu0 0.0
        %2091 = vmatpush2.msra.mxu0 0.0
        %2092 = vmatprep.subr.mxu0 0.0
        %2093 = vmatpush2.msra.mxu0 0.0
        %2094 = vmatprep.mubr.f32.mxu0 0.0
        %2095 = vmatmul.mubr.f32.gmra.mxu0 %v2025
        %v2096 = vpop.f32.mrf.mxu0
        %v2097 = vadd.f32 0.0, %v2096
        %v2098 = vpop.f32.mrf.mxu0
        %2099 = vmatprep.mubr.f32.mxu0 0.0
        %2100 = vmatmul.mubr.f32.gmra.mxu0 %v2028
        %v2101 = vpop.f32.mrf.mxu0
        %v2102 = vadd.f32 0.0, %v2101
        %v2103 = vpop.f32.mrf.mxu0
        %2104 = vdwg.mxu0
        %v2105 = vadd.f32 %v481, %v2097
        %v2106 = vadd.f32 %v482, %v2102
        %v2107 = vlaneseq
        %v2108 = vshrl.u32 %v2107, 7
        %v2109 = vsub.s32 7, %v2108
        %v2110 = vrot.slane %v485, %v2109
        %v2111 = vadd.f32 %v2105, %v2110
        %v2112 = vadd.f32 %v2106, %v2110
        %v2113 = vsel %vm488, %v2111, 0.0
        %2114 = vadd.xlane.f32.xlu0 %v2113
        %v2115 = vpop.xlane.xlu0 %2114
        %v2116 = vsel %vm488, %v2112, 0.0
        %2117 = vadd.xlane.f32.xlu0 %v2116
        %v2118 = vpop.xlane.xlu0 %2117
        %v2119 = vmul.f32 %v2115, %v495
        %v2120 = vmul.f32 %v2118, %v495
        %v2121 = vsub.f32 %v2111, %v2119
        %v2122 = vsub.f32 %v2112, %v2120
        %v2123 = vmul.f32 %v2121, %v2121
        %v2124 = vmul.f32 %v2122, %v2122
        %v2125 = vsel %vm488, %v2123, 0.0
        %2126 = vadd.xlane.f32.xlu0 %v2125
        %v2127 = vpop.xlane.xlu0 %2126
        %v2128 = vsel %vm488, %v2124, 0.0
        %2129 = vadd.xlane.f32.xlu0 %v2128
        %v2130 = vpop.xlane.xlu0 %2129
        %v2131 = vmul.f32 %v2127, 0.032258064
        %v2132 = vmul.f32 %v2130, 0.032258064
        %v2133 = vrsqrt.pop %v2131
        %v2134 = vmul.f32 %v2131, %v2133
        %vm2135 = vcmp.eq.f32.partialorder %v2131, inf
        %v2136 = vsel %vm2135, %v2131, %v2134
        %vm2137 = vcmp.eq.f32.partialorder %v2131, 0.0
        %v2138 = vand.u32 %v2131, 2147483648
        %v2139 = vsel %vm2137, %v2138, %v2136
        %v2140 = vrsqrt.pop %v2132
        %v2141 = vmul.f32 %v2132, %v2140
        %vm2142 = vcmp.eq.f32.partialorder %v2132, inf
        %v2143 = vsel %vm2142, %v2132, %v2141
        %vm2144 = vcmp.eq.f32.partialorder %v2132, 0.0
        %v2145 = vand.u32 %v2132, 2147483648
        %v2146 = vsel %vm2144, %v2145, %v2143
        %v2147 = vadd.f32 %v2139, 1e-06
        %v2148 = vadd.f32 %v2146, 1e-06
        %v2149 = vrcp.pop %v2147
        %v2150 = vrcp.pop %v2148
        %v2151 = vlaneseq
        %v2152 = vshrl.u32 %v2151, 7
        %v2153 = vsub.s32 2, %v2152
        %v2154 = vrot.slane %v485, %v2153
        %v2155 = vmul.f32 %v2154, %v2121
        %v2156 = vmul.f32 %v2154, %v2122
        %v2157 = vmul.f32 %v2155, %v2149
        %v2158 = vmul.f32 %v2156, %v2150
        %v2159 = vlaneseq
        %v2160 = vshrl.u32 %v2159, 7
        %v2161 = vsub.s32 3, %v2160
        %v2162 = vrot.slane %v485, %v2161
        %v2163 = vadd.f32 %v2157, %v2162
        %v2164 = vadd.f32 %v2158, %v2162
        %v2165 = vld [vmem:[%s457] sm:$0xff]
        %v2166 = vld [vmem:[%s457 + $0x8] sm:$0xff]
        %v2167 = vld [vmem:[%s457 + $0x10] sm:$0xff]
        %v2168 = vld [vmem:[%s457 + $0x18] sm:$0xff]
        %v2170 = vlaneseq
        %v2171 = vshrl.u32 %v2170, 7
        %v2172 = vsub.s32 0, %v2171
        %v2173 = vrot.slane %v487, %v2172
        %v2176 = vsel %vm488, %v2163, 0
        %v2179 = vsel %vm488, %v2164, 0
        %2181 = vmatprep.subr.mxu0 0.0
        %2182 = vmatpush1.msra.mxu0 0.0
        %2183 = vmatprep.subr.mxu0 0.0
        %2184 = vmatpush1.msra.mxu0 0.0
        %2185 = vmatprep.subr.mxu0 0.0
        %2186 = vmatpush1.msra.mxu0 0.0
        %2187 = vmatprep.subr.mxu0 0.0
        %2188 = vmatpush1.msra.mxu0 0.0
        %2189 = vmatprep.subr.mxu0 0.0
        %2190 = vmatpush1.msra.mxu0 0.0
        %2191 = vmatprep.subr.mxu0 0.0
        %2192 = vmatpush1.msra.mxu0 0.0
        %2193 = vmatprep.subr.mxu0 0.0
        %2194 = vmatpush1.msra.mxu0 0.0
        %2195 = vmatprep.subr.mxu0 0.0
        %2196 = vmatpush1.msra.mxu0 0.0
        %2197 = vmatprep.subr.mxu0 0.0
        %2198 = vmatpush1.msra.mxu0 0.0
        %2199 = vmatprep.subr.mxu0 0.0
        %2200 = vmatpush1.msra.mxu0 0.0
        %2201 = vmatprep.subr.mxu0 0.0
        %2202 = vmatpush1.msra.mxu0 0.0
        %2203 = vmatprep.subr.mxu0 0.0
        %2204 = vmatpush1.msra.mxu0 0.0
        %2205 = vmatprep.subr.mxu0 0.0
        %2206 = vmatpush1.msra.mxu0 %v2168
        %2207 = vmatprep.subr.mxu0 0.0
        %2208 = vmatpush1.msra.mxu0 %v2167
        %2209 = vmatprep.subr.mxu0 0.0
        %2210 = vmatpush1.msra.mxu0 %v2166
        %2211 = vmatprep.subr.mxu0 0.0
        %2212 = vmatpush1.msra.mxu0 %v2165
        %2213 = vmatprep.subr.mxu0 0.0
        %2214 = vmatpush2.msra.mxu0 0.0
        %2215 = vmatprep.subr.mxu0 0.0
        %2216 = vmatpush2.msra.mxu0 0.0
        %2217 = vmatprep.subr.mxu0 0.0
        %2218 = vmatpush2.msra.mxu0 0.0
        %2219 = vmatprep.subr.mxu0 0.0
        %2220 = vmatpush2.msra.mxu0 0.0
        %2221 = vmatprep.subr.mxu0 0.0
        %2222 = vmatpush2.msra.mxu0 0.0
        %2223 = vmatprep.subr.mxu0 0.0
        %2224 = vmatpush2.msra.mxu0 0.0
        %2225 = vmatprep.subr.mxu0 0.0
        %2226 = vmatpush2.msra.mxu0 0.0
        %2227 = vmatprep.subr.mxu0 0.0
        %2228 = vmatpush2.msra.mxu0 0.0
        %2229 = vmatprep.subr.mxu0 0.0
        %2230 = vmatpush2.msra.mxu0 0.0
        %2231 = vmatprep.subr.mxu0 0.0
        %2232 = vmatpush2.msra.mxu0 0.0
        %2233 = vmatprep.subr.mxu0 0.0
        %2234 = vmatpush2.msra.mxu0 0.0
        %2235 = vmatprep.subr.mxu0 0.0
        %2236 = vmatpush2.msra.mxu0 0.0
        %2237 = vmatprep.subr.mxu0 0.0
        %2238 = vmatpush2.msra.mxu0 0.0
        %2239 = vmatprep.subr.mxu0 0.0
        %2240 = vmatpush2.msra.mxu0 0.0
        %2241 = vmatprep.subr.mxu0 0.0
        %2242 = vmatpush2.msra.mxu0 0.0
        %2243 = vmatprep.subr.mxu0 0.0
        %2244 = vmatpush2.msra.mxu0 0.0
        %2245 = vmatprep.mubr.f32.mxu0 0.0
        %2246 = vmatmul.mubr.f32.gmra.mxu0 %v2176
        %v2247 = vpop.f32.mrf.mxu0
        %v2248 = vadd.f32 %v2173, %v2247
        %v2249 = vpop.f32.mrf.mxu0
        %2250 = vmatprep.mubr.f32.mxu0 0.0
        %2251 = vmatmul.mubr.f32.gmra.mxu0 %v2179
        %v2252 = vpop.f32.mrf.mxu0
        %v2253 = vadd.f32 %v2173, %v2252
        %v2254 = vpop.f32.mrf.mxu0
        %2255 = vdwg.mxu0
        %v2256 = vmax.f32 %v2248, 0.0
        %v2257 = vmax.f32 %v2253, 0.0
        %v2258 = vld [vmem:[%s462] sm:$0xff]
        %v2259 = vld [vmem:[%s462 + $0x8] sm:$0xff]
        %v2260 = vld [vmem:[%s462 + $0x10] sm:$0xff]
        %v2261 = vld [vmem:[%s462 + $0x18] sm:$0xff]
        %v2262 = vld [vmem:[%s462 + $0x20] sm:$0xff]
        %v2263 = vld [vmem:[%s462 + $0x28] sm:$0xff]
        %v2264 = vld [vmem:[%s462 + $0x30] sm:$0xff]
        %v2265 = vld [vmem:[%s462 + $0x38] sm:$0xff]
        %vm2266 = vcmask 523264
        %v2268 = vsel %vm2266, %v2256, 0
        %v2271 = vsel %vm2266, %v2257, 0
        %2273 = vmatprep.subr.mxu0 0.0
        %2274 = vmatpush1.msra.mxu0 0.0
        %2275 = vmatprep.subr.mxu0 0.0
        %2276 = vmatpush1.msra.mxu0 0.0
        %2277 = vmatprep.subr.mxu0 0.0
        %2278 = vmatpush1.msra.mxu0 0.0
        %2279 = vmatprep.subr.mxu0 0.0
        %2280 = vmatpush1.msra.mxu0 0.0
        %2281 = vmatprep.subr.mxu0 0.0
        %2282 = vmatpush1.msra.mxu0 0.0
        %2283 = vmatprep.subr.mxu0 0.0
        %2284 = vmatpush1.msra.mxu0 0.0
        %2285 = vmatprep.subr.mxu0 0.0
        %2286 = vmatpush1.msra.mxu0 0.0
        %2287 = vmatprep.subr.mxu0 0.0
        %2288 = vmatpush1.msra.mxu0 0.0
        %2289 = vmatprep.subr.mxu0 0.0
        %2290 = vmatpush1.msra.mxu0 %v2265
        %2291 = vmatprep.subr.mxu0 0.0
        %2292 = vmatpush1.msra.mxu0 %v2264
        %2293 = vmatprep.subr.mxu0 0.0
        %2294 = vmatpush1.msra.mxu0 %v2263
        %2295 = vmatprep.subr.mxu0 0.0
        %2296 = vmatpush1.msra.mxu0 %v2262
        %2297 = vmatprep.subr.mxu0 0.0
        %2298 = vmatpush1.msra.mxu0 %v2261
        %2299 = vmatprep.subr.mxu0 0.0
        %2300 = vmatpush1.msra.mxu0 %v2260
        %2301 = vmatprep.subr.mxu0 0.0
        %2302 = vmatpush1.msra.mxu0 %v2259
        %2303 = vmatprep.subr.mxu0 0.0
        %2304 = vmatpush1.msra.mxu0 %v2258
        %2305 = vmatprep.subr.mxu0 0.0
        %2306 = vmatpush2.msra.mxu0 0.0
        %2307 = vmatprep.subr.mxu0 0.0
        %2308 = vmatpush2.msra.mxu0 0.0
        %2309 = vmatprep.subr.mxu0 0.0
        %2310 = vmatpush2.msra.mxu0 0.0
        %2311 = vmatprep.subr.mxu0 0.0
        %2312 = vmatpush2.msra.mxu0 0.0
        %2313 = vmatprep.subr.mxu0 0.0
        %2314 = vmatpush2.msra.mxu0 0.0
        %2315 = vmatprep.subr.mxu0 0.0
        %2316 = vmatpush2.msra.mxu0 0.0
        %2317 = vmatprep.subr.mxu0 0.0
        %2318 = vmatpush2.msra.mxu0 0.0
        %2319 = vmatprep.subr.mxu0 0.0
        %2320 = vmatpush2.msra.mxu0 0.0
        %2321 = vmatprep.subr.mxu0 0.0
        %2322 = vmatpush2.msra.mxu0 0.0
        %2323 = vmatprep.subr.mxu0 0.0
        %2324 = vmatpush2.msra.mxu0 0.0
        %2325 = vmatprep.subr.mxu0 0.0
        %2326 = vmatpush2.msra.mxu0 0.0
        %2327 = vmatprep.subr.mxu0 0.0
        %2328 = vmatpush2.msra.mxu0 0.0
        %2329 = vmatprep.subr.mxu0 0.0
        %2330 = vmatpush2.msra.mxu0 0.0
        %2331 = vmatprep.subr.mxu0 0.0
        %2332 = vmatpush2.msra.mxu0 0.0
        %2333 = vmatprep.subr.mxu0 0.0
        %2334 = vmatpush2.msra.mxu0 0.0
        %2335 = vmatprep.subr.mxu0 0.0
        %2336 = vmatpush2.msra.mxu0 0.0
        %2337 = vmatprep.mubr.f32.mxu0 0.0
        %2338 = vmatmul.mubr.f32.gmra.mxu0 %v2268
        %v2339 = vpop.f32.mrf.mxu0
        %v2340 = vadd.f32 0.0, %v2339
        %v2341 = vpop.f32.mrf.mxu0
        %2342 = vmatprep.mubr.f32.mxu0 0.0
        %2343 = vmatmul.mubr.f32.gmra.mxu0 %v2271
        %v2344 = vpop.f32.mrf.mxu0
        %v2345 = vadd.f32 0.0, %v2344
        %v2346 = vpop.f32.mrf.mxu0
        %2347 = vdwg.mxu0
        %v2348 = vadd.f32 %v2111, %v2340
        %v2349 = vadd.f32 %v2112, %v2345
        %v2350 = vlaneseq
        %v2351 = vshrl.u32 %v2350, 7
        %v2352 = vsub.s32 0, %v2351
        %v2353 = vrot.slane %v486, %v2352
        %v2354 = vadd.f32 %v2348, %v2353
        %v2355 = vadd.f32 %v2349, %v2353
        %2356 = vst.msk [vmem:[#allocation2] sm:$0xff] %vm488, %v2354
        %2357 = vst.msk [vmem:[#allocation2 + $0x8] sm:$0xff] %vm488, %v2355
        %p2358 = scmp.eq.s32.totalorder %s26, 1
        // Predicated region
        $region61: #{tpu_custom_call.1} parent=55 // pred_check
          %p2359 = pneg %p2358
        $region62: #{tpu_custom_call.1} parent=55 // pred_check_branch
          %2361 = sbr.rel (%p2359) target = $region64
        $region63: #{tpu_custom_call.1} parent=55 // pred_region
          %v2362 = vld [vmem:[%s8] sm:$0x3]
          %v2363 = vsel %vm488, %v2354, 0.0
          %2364 = vadd.xlane.f32.xlu0 %v2363
          %v2365 = vpop.xlane.xlu0 %2364
          %v2366 = vsel %vm488, %v2355, 0.0
          %2367 = vadd.xlane.f32.xlu0 %v2366
          %v2368 = vpop.xlane.xlu0 %2367
          %v2369 = vmul.f32 %v2365, %v495
          %v2370 = vmul.f32 %v2368, %v495
          %v2371 = vsub.f32 %v2354, %v2369
          %v2372 = vsub.f32 %v2355, %v2370
          %v2373 = vmul.f32 %v2371, %v2371
          %v2374 = vmul.f32 %v2372, %v2372
          %v2375 = vsel %vm488, %v2373, 0.0
          %2376 = vadd.xlane.f32.xlu0 %v2375
          %v2377 = vpop.xlane.xlu0 %2376
          %v2378 = vsel %vm488, %v2374, 0.0
          %2379 = vadd.xlane.f32.xlu0 %v2378
          %v2380 = vpop.xlane.xlu0 %2379
          %v2381 = vmul.f32 %v2377, 0.032258064
          %v2382 = vmul.f32 %v2380, 0.032258064
          %v2383 = vrsqrt.pop %v2381
          %v2384 = vmul.f32 %v2381, %v2383
          %vm2385 = vcmp.eq.f32.partialorder %v2381, inf
          %v2386 = vsel %vm2385, %v2381, %v2384
          %vm2387 = vcmp.eq.f32.partialorder %v2381, 0.0
          %v2388 = vand.u32 %v2381, 2147483648
          %v2389 = vsel %vm2387, %v2388, %v2386
          %v2390 = vrsqrt.pop %v2382
          %v2391 = vmul.f32 %v2382, %v2390
          %vm2392 = vcmp.eq.f32.partialorder %v2382, inf
          %v2393 = vsel %vm2392, %v2382, %v2391
          %vm2394 = vcmp.eq.f32.partialorder %v2382, 0.0
          %v2395 = vand.u32 %v2382, 2147483648
          %v2396 = vsel %vm2394, %v2395, %v2393
          %v2397 = vadd.f32 %v2389, 1e-06
          %v2398 = vadd.f32 %v2396, 1e-06
          %v2399 = vrcp.pop %v2397
          %v2400 = vrcp.pop %v2398
          %v2401 = vlaneseq
          %v2402 = vshrl.u32 %v2401, 7
          %v2403 = vsub.s32 0, %v2402
          %v2404 = vrot.slane %v2362, %v2403
          %v2405 = vmul.f32 %v2404, %v2371
          %v2406 = vmul.f32 %v2404, %v2372
          %v2407 = vmul.f32 %v2405, %v2399
          %v2408 = vmul.f32 %v2406, %v2400
          %v2409 = vlaneseq
          %v2410 = vshrl.u32 %v2409, 7
          %v2411 = vsub.s32 1, %v2410
          %v2412 = vrot.slane %v2362, %v2411
          %v2413 = vadd.f32 %v2407, %v2412
          %v2414 = vadd.f32 %v2408, %v2412
          %2415 = vst.msk [vmem:[#allocation3] sm:$0xff] %vm488, %v2413
          %2416 = vst.msk [vmem:[#allocation3 + $0x8] sm:$0xff] %vm488, %v2414
        $region64: #{tpu_custom_call.1} parent=55 // pred_fallthru
          _
        // Predicated region
        $region65: #{tpu_custom_call.1} parent=55 // pred_check
          %p2417 = pneg %p280
        $region66: #{tpu_custom_call.1} parent=55 // pred_check_branch
          %2419 = sbr.rel (%p2417) target = $region68
        $region67: #{tpu_custom_call.1} parent=55 // pred_region
          %s2420 = smul.u32 2, %s25
          %s2422 = ssub.s32 256, 256
          %2423 = vsyncadd [#allocation4], %s2422
          %s2424 = smul.addr %s2420, 128
          %s2425 = scalar_lea.hbm %s9, %s2424
          %s2426 = sshll.u32 [#allocation3], 4
          %s2427 = int_to_ptr.vmem [resolvable:$true] %s2426
          %2432 = dma.vmem_to_hbm [thread:$0]  %s2427, 256, %s2425, [#allocation4], 128, 128, 8
        $region68: #{tpu_custom_call.1} parent=55 // pred_fallthru
          _
        // Predicated region
        $region69: #{tpu_custom_call.1} parent=55 // pred_check
          %p2433 = pneg %p280
        $region70: #{tpu_custom_call.1} parent=55 // pred_check_branch
          %2435 = sbr.rel (%p2433) target = $region72
        $region71: #{tpu_custom_call.1} parent=55 // pred_region
          %2436 = dma.done [#allocation4], 256
        $region72: #{tpu_custom_call.1} parent=55 // pred_fallthru
          _
      $region56: #{tpu_custom_call.1} parent=5 // pred_fallthru
        _
      %p2437 = scmp.le.s32.totalorder 2, %s16
      // Predicated region
      $region73: #{tpu_custom_call.1} parent=5 // pred_check
        %p2438 = pneg %p2437
      $region74: #{tpu_custom_call.1} parent=5 // pred_check_branch
        %2440 = sbr.rel (%p2438) target = $region76
      $region75: #{tpu_custom_call.1} parent=5 // pred_region
        %s2441 = ssub.s32 %s16, 2
      $region76: #{tpu_custom_call.1} parent=5 // pred_fallthru
        _
    $region6: #{tpu_custom_call.1} parent=1 // loop_footer
      %s20 = sadd.s32 1, %s16
    $region7: #{tpu_custom_call.1} parent=1 // loop_footer_branch
      %15 = sbr.rel target = $region3
    $region8: #{tpu_custom_call.1} parent=1 // loop_exit
      _
    %2442 = vsyncpa [#allocation4], 1
    %s2443 = scalar_lea.sflag [#allocation4], 1
    %2444 = vsyncpa %s2443, 1

</llo_original>
